<compile_context>
chip_gen: v7x
topology: tpu7x:2x2x1
jax: 0.10.0
libtpu: 0.0.40
codegen_flags: <defaults>
</compile_context>

<pallas_src>
import jax
import jax.numpy as jnp
from jax import lax
from jax.experimental import pallas as pl
from jax.experimental.pallas import tpu as pltpu

# ----------------------------- hyperparameters -----------------------------
HIDDEN_SIZE = 32      # Settings.hyperparameters['LSTMHiddenSize']
NUM_LAYERS = 2        # Settings.hyperparameters['LSTMLayers']
BATCH_SIZE = 2        # Settings.hyperparameters['batchSize']
INPUT_SIZE = 128      # fixed by the module
OUT_FEATURES = 128    # nn.Linear(hidden, 128)
SEQ_LEN = 8
NEG_SLOPE = 0.01      # LeakyReLU default


# ------------------------------ fused kernel --------------------------------
def _make_fused_kernel(num_layers, T, B, H, K):
    """Builds the fused LSTMnet kernel.

    Ref layout (all time-major-flat: row index = t*B + b):
      refs = [x (T*B, D)]
             + [w_ih_l (Din_l, 4H), w_hh_l (H, 4H), bias_l (1, 4H)] * num_layers
             + [w_out (H, K)]
             + [out (T*B, K)]
             + [gx_sc (T*B, 4H), hseq_sc (T*B, H)]   # VMEM scratch
    """
    TB = T * B

    def kernel(*refs):
        x_ref = refs[0]
        w_refs = refs[1:1 + 3 * num_layers]
        wout_ref = refs[1 + 3 * num_layers]
        out_ref = refs[2 + 3 * num_layers]
        gx_sc, hseq_sc = refs[3 + 3 * num_layers:]

        f32 = jnp.float32

        # Per-lane activation constants for the fused full-vreg nonlinearity.
        # Gate lane order: [ i | f | g | o ].  sigmoid(x) = 0.5*tanh(0.5*x)+0.5,
        # candidate g uses plain tanh.  Built once at (B, 4H) — no per-step
        # broadcast_in_dim inside the unrolled recurrence.
        sig = jnp.full((B, H), 0.5, f32)
        one = jnp.ones((B, H), f32)
        zero = jnp.zeros((B, H), f32)
        pre = jnp.concatenate([sig, sig, one, sig], axis=1)        # (B, 4H)
        post_scale = pre                                           # same values
        post_bias = jnp.concatenate([sig, sig, zero, sig], axis=1)  # (B, 4H)

        def run_layer(layer):
            # ---- hoisted input projection: ONE (T*B, Din) @ (Din, 4H) GEMM ----
            seq_in = x_ref[...] if layer == 0 else hseq_sc[...]
            gx_sc[...] = (jnp.dot(seq_in, w_refs[3 * layer][...],
                                  preferred_element_type=f32)
                          + w_refs[3 * layer + 2][...])
            w_hh = w_refs[3 * layer + 1][...]        # hoisted: loaded once

            h = jnp.zeros((B, H), f32)
            c = jnp.zeros((B, H), f32)
            # Static time loop: every slice start is a Python int; each step
            # touches one contiguous time-major (B, 4H)/(B, H) block.
            for t in range(T):
                gates = gx_sc[t * B:(t + 1) * B, :] + jnp.dot(
                    h, w_hh, preferred_element_type=f32)
                # One EUP push activates all four gates.
                act = post_scale * jnp.tanh(pre * gates) + post_bias
                i_g = act[:, 0 * H:1 * H]
                f_g = act[:, 1 * H:2 * H]
                g_g = act[:, 2 * H:3 * H]
                o_g = act[:, 3 * H:4 * H]
                c = f_g * c + i_g * g_g
                h = o_g * jnp.tanh(c)
                hseq_sc[t * B:(t + 1) * B, :] = h

        for layer in range(num_layers):
            run_layer(layer)

        # ---- head: LeakyReLU -> single (T*B, H) @ (H, K) GEMM -> LogSoftmax ----
        hh = hseq_sc[...]
        hh = jnp.where(hh >= 0, hh, f32(NEG_SLOPE) * hh)
        y = jnp.dot(hh, wout_ref[...], preferred_element_type=f32)   # (T*B, K)

        # LogSoftmax over the TIME axis (PyTorch dim=1 of (B, T, K)).  With
        # time-major rows (row = t*B + b) batch b owns rows {b, b+B, ...}; the
        # reduction is done with full-slab masked ops (no strided slicing,
        # no per-row gathers) — cheap tail work off the recurrence chain.
        row_b = lax.broadcasted_iota(jnp.int32, (TB, K), 0) % B
        out_val = jnp.zeros((TB, K), f32)
        for b in range(B):
            mask = row_b == b
            m = jnp.max(jnp.where(mask, y, -jnp.inf), axis=0, keepdims=True)
            z = y - m
            s = jnp.sum(jnp.where(mask, jnp.exp(z), 0.0), axis=0, keepdims=True)
            out_val = jnp.where(mask, z - jnp.log(s), out_val)
        out_ref[...] = out_val.astype(out_ref.dtype)

    return kernel


# ------------------------------- full forward -------------------------------
@jax.jit
def lstmnet_forward(x_btd, params):
    """x_btd: (B, T, 128) batch_first, like PyTorch. Returns (B, T, 128)."""
    B, T, D = x_btd.shape
    H = params["lstm_layers"][0][1].shape[0]
    K = params["w_out"].shape[1]
    L = len(params["lstm_layers"])

    # Time-major flat layout: row = t*B + b.  The tiny transpose lives in XLA,
    # outside the kernel, so the serial recurrence sees only contiguous blocks.
    x_flat = jnp.transpose(x_btd, (1, 0, 2)).reshape(T * B, D).astype(jnp.float32)

    weights = []
    in_specs = [pl.BlockSpec((T * B, D), lambda i: (0, 0))]
    for (w_ih, w_hh, bias) in params["lstm_layers"]:
        weights += [w_ih, w_hh, bias]
        in_specs += [pl.BlockSpec(w_ih.shape, lambda i: (0, 0)),
                     pl.BlockSpec(w_hh.shape, lambda i: (0, 0)),
                     pl.BlockSpec(bias.shape, lambda i: (0, 0))]
    weights.append(params["w_out"])
    in_specs.append(pl.BlockSpec(params["w_out"].shape, lambda i: (0, 0)))

    out_flat = pl.pallas_call(
        _make_fused_kernel(L, T, B, H, K),
        out_shape=jax.ShapeDtypeStruct((T * B, K), jnp.float32),
        grid=(1,),
        in_specs=in_specs,
        out_specs=pl.BlockSpec((T * B, K), lambda i: (0, 0)),
        scratch_shapes=[
            pltpu.VMEM((T * B, 4 * H), jnp.float32),   # hoisted per-layer gates
            pltpu.VMEM((T * B, H), jnp.float32),       # layer hidden sequence
        ],
        compiler_params=pltpu.CompilerParams(
            dimension_semantics=("arbitrary",)),
    )(x_flat, *weights)

    # time-major flat -> (T, B, K) -> batch_first (B, T, K); reshape is free,
    # the transpose is ~8 KB of tail work in XLA.
    return jnp.transpose(out_flat.reshape(T, B, K), (1, 0, 2))


# ----------------------------- deterministic init ---------------------------
def init_params(key, input_size, hidden_size, num_layers, out_features):
    k = 1.0 / jnp.sqrt(jnp.float32(hidden_size))
    layers = []
    for layer in range(num_layers):
        din = input_size if layer == 0 else hidden_size
        key, k1, k2, k3, k4 = jax.random.split(key, 5)
        # PyTorch stores weight_ih as (4H, Din); we keep the transposed (Din, 4H)
        # layout so the kernel does x @ W directly. Gate order: i, f, g, o.
        w_ih = jax.random.uniform(k1, (din, 4 * hidden_size), jnp.float32, -k, k)
        w_hh = jax.random.uniform(k2, (hidden_size, 4 * hidden_size),
                                  jnp.float32, -k, k)
        b_ih = jax.random.uniform(k3, (4 * hidden_size,), jnp.float32, -k, k)
        b_hh = jax.random.uniform(k4, (4 * hidden_size,), jnp.float32, -k, k)
        layers.append((w_ih, w_hh, (b_ih + b_hh).reshape(1, 4 * hidden_size)))
    key, k5 = jax.random.split(key)
    # nn.Linear(hidden, 128, bias=False): weight (128, H); stored transposed.
    kl = 1.0 / jnp.sqrt(jnp.float32(hidden_size))
    w_out = jax.random.uniform(k5, (hidden_size, out_features),
                               jnp.float32, -kl, kl)
    return {"lstm_layers": layers, "w_out": w_out}


# ------------------------------ pure-JAX reference --------------------------
def reference_forward(x_btd, params):
    x = jnp.transpose(x_btd, (1, 0, 2)).astype(jnp.float32)  # (T, B, D)
    T, B, _ = x.shape
    for (w_ih, w_hh, bias) in params["lstm_layers"]:
        H = w_hh.shape[0]
        h = jnp.zeros((B, H), jnp.float32)
        c = jnp.zeros((B, H), jnp.float32)
        outs = []
        for t in range(T):
            g = x[t] @ w_ih + h @ w_hh + bias
            i_g = jax.nn.sigmoid(g[:, 0 * H:1 * H])
            f_g = jax.nn.sigmoid(g[:, 1 * H:2 * H])
            g_g = jnp.tanh(g[:, 2 * H:3 * H])
            o_g = jax.nn.sigmoid(g[:, 3 * H:4 * H])
            c = f_g * c + i_g * g_g
            h = o_g * jnp.tanh(c)
            outs.append(h)
        x = jnp.stack(outs, axis=0)
    y = jnp.where(x >= 0, x, NEG_SLOPE * x)
    y = jnp.einsum('tbh,hk->tbk', y, params["w_out"])
    y = jax.nn.log_softmax(y, axis=0)         # time axis == PyTorch dim=1
    return jnp.transpose(y, (1, 0, 2))


# ------------------------------------ main -----------------------------------
if __name__ == "__main__":
    key = jax.random.PRNGKey(0)
    pkey, xkey = jax.random.split(key)
    params = init_params(pkey, INPUT_SIZE, HIDDEN_SIZE, NUM_LAYERS, OUT_FEATURES)
    x = jax.random.normal(xkey, (BATCH_SIZE, SEQ_LEN, INPUT_SIZE), jnp.float32)

    out = lstmnet_forward(x, params)
    out = jax.block_until_ready(out)

    ref = reference_forward(x, params)
    assert out.shape == (BATCH_SIZE, SEQ_LEN, OUT_FEATURES), out.shape
    assert bool(jnp.all(jnp.isfinite(out)))
    assert bool(jnp.allclose(out, ref, rtol=2e-3, atol=2e-3)), (
        float(jnp.max(jnp.abs(out - ref))))

    print("KERNEL_OK")
</pallas_src>

<mosaic_0001>
module attributes {stable_mosaic.version = 11 : i64} {
  func.func @kernel(%arg0: i32, %arg1: memref<16x128xf32, #tpu.memory_space<vmem>>, %arg2: memref<128x128xf32, #tpu.memory_space<vmem>>, %arg3: memref<32x128xf32, #tpu.memory_space<vmem>>, %arg4: memref<1x128xf32, #tpu.memory_space<vmem>>, %arg5: memref<32x128xf32, #tpu.memory_space<vmem>>, %arg6: memref<32x128xf32, #tpu.memory_space<vmem>>, %arg7: memref<1x128xf32, #tpu.memory_space<vmem>>, %arg8: memref<32x128xf32, #tpu.memory_space<vmem>>, %arg9: memref<16x128xf32, #tpu.memory_space<vmem>>, %arg10: memref<16x128xf32, #tpu.memory_space<vmem>>, %arg11: memref<16x32xf32, #tpu.memory_space<vmem>>) attributes {dimension_semantics = [#tpu.dimension_semantics<arbitrary>], iteration_bounds = array<i64: 1>, scalar_prefetch = 0 : i64, scratch_operands = 2 : i64, tpu.core_type = #tpu.core_type<tc>, window_params = [{pipeline_mode = #tpu.pipeline_mode<synchronous>, transform_indices = @transform_0, window_bounds = array<i64: 16, 128>}, {pipeline_mode = #tpu.pipeline_mode<synchronous>, transform_indices = @transform_1, window_bounds = array<i64: 128, 128>}, {pipeline_mode = #tpu.pipeline_mode<synchronous>, transform_indices = @transform_2, window_bounds = array<i64: 32, 128>}, {pipeline_mode = #tpu.pipeline_mode<synchronous>, transform_indices = @transform_3, window_bounds = array<i64: 1, 128>}, {pipeline_mode = #tpu.pipeline_mode<synchronous>, transform_indices = @transform_4, window_bounds = array<i64: 32, 128>}, {pipeline_mode = #tpu.pipeline_mode<synchronous>, transform_indices = @transform_5, window_bounds = array<i64: 32, 128>}, {pipeline_mode = #tpu.pipeline_mode<synchronous>, transform_indices = @transform_6, window_bounds = array<i64: 1, 128>}, {pipeline_mode = #tpu.pipeline_mode<synchronous>, transform_indices = @transform_7, window_bounds = array<i64: 32, 128>}, {pipeline_mode = #tpu.pipeline_mode<synchronous>, transform_indices = @transform_8, window_bounds = array<i64: 16, 128>}]} {
    %cst = arith.constant 5.000000e-01 : f32
    %0 = vector.broadcast %cst : f32 to vector<2x32xf32>
    %cst_0 = arith.constant 1.000000e+00 : f32
    %1 = vector.broadcast %cst_0 : f32 to vector<2x32xf32>
    %cst_1 = arith.constant 0.000000e+00 : f32
    %2 = vector.broadcast %cst_1 : f32 to vector<2x32xf32>
    %3 = tpu.concatenate %0, %0, %1, %0 in 1 : vector<2x32xf32>, vector<2x32xf32>, vector<2x32xf32>, vector<2x32xf32> -> vector<2x128xf32>
    %4 = tpu.concatenate %0, %0, %2, %0 in 1 : vector<2x32xf32>, vector<2x32xf32>, vector<2x32xf32>, vector<2x32xf32> -> vector<2x128xf32>
    %c0 = arith.constant 0 : index
    %c0_2 = arith.constant 0 : index
    %5 = vector.load %arg1[%c0, %c0_2] : memref<16x128xf32, #tpu.memory_space<vmem>>, vector<16x128xf32>
    %c0_3 = arith.constant 0 : index
    %c0_4 = arith.constant 0 : index
    %6 = vector.load %arg2[%c0_3, %c0_4] : memref<128x128xf32, #tpu.memory_space<vmem>>, vector<128x128xf32>
    %cst_5 = arith.constant dense<0.000000e+00> : vector<16x128xf32>
    %7 = tpu.matmul %5, %6, %cst_5 {dimension_numbers = #tpu.dot_dimension_numbers<[1], [0], [0], [1], [0, 0, 1, 1], [], []>} : vector<16x128xf32>, vector<128x128xf32>, vector<16x128xf32> -> vector<16x128xf32>
    %c0_6 = arith.constant 0 : index
    %c0_7 = arith.constant 0 : index
    %8 = vector.load %arg4[%c0_6, %c0_7] : memref<1x128xf32, #tpu.memory_space<vmem>>, vector<1x128xf32>
    %9 = vector.broadcast %8 : vector<1x128xf32> to vector<16x128xf32>
    %10 = arith.addf %7, %9 : vector<16x128xf32>
    %c0_8 = arith.constant 0 : index
    %c0_9 = arith.constant 0 : index
    %11 = vector.load %arg10[%c0_8, %c0_9] : memref<16x128xf32, #tpu.memory_space<vmem>>, vector<16x128xf32>
    tpu.vector_store %arg10[%c0_8, %c0_9], %10 {strides = array<i32>} : memref<16x128xf32, #tpu.memory_space<vmem>>, vector<16x128xf32>,
    %c0_10 = arith.constant 0 : index
    %c0_11 = arith.constant 0 : index
    %12 = vector.load %arg3[%c0_10, %c0_11] : memref<32x128xf32, #tpu.memory_space<vmem>>, vector<32x128xf32>
    %cst_12 = arith.constant 0.000000e+00 : f32
    %13 = vector.broadcast %cst_12 : f32 to vector<2x32xf32>
    %cst_13 = arith.constant 0.000000e+00 : f32
    %14 = vector.broadcast %cst_13 : f32 to vector<2x32xf32>
    %c0_14 = arith.constant 0 : index
    %c0_15 = arith.constant 0 : index
    %15 = vector.load %arg10[%c0_14, %c0_15] : memref<16x128xf32, #tpu.memory_space<vmem>>, vector<2x128xf32>
    %cst_16 = arith.constant dense<0.000000e+00> : vector<2x128xf32>
    %16 = tpu.matmul %13, %12, %cst_16 {dimension_numbers = #tpu.dot_dimension_numbers<[1], [0], [0], [1], [0, 0, 1, 1], [], []>} : vector<2x32xf32>, vector<32x128xf32>, vector<2x128xf32> -> vector<2x128xf32>
    %17 = arith.addf %15, %16 : vector<2x128xf32>
    %18 = arith.mulf %3, %17 : vector<2x128xf32>
    %19 = math.tanh %18 : vector<2x128xf32>
    %20 = arith.mulf %3, %19 : vector<2x128xf32>
    %21 = arith.addf %20, %4 : vector<2x128xf32>
    %22 = vector.extract_strided_slice %21 {offsets = [0, 0], sizes = [2, 32], strides = [1, 1]} : vector<2x128xf32> to vector<2x32xf32>
    %23 = vector.extract_strided_slice %21 {offsets = [0, 32], sizes = [2, 32], strides = [1, 1]} : vector<2x128xf32> to vector<2x32xf32>
    %24 = vector.extract_strided_slice %21 {offsets = [0, 64], sizes = [2, 32], strides = [1, 1]} : vector<2x128xf32> to vector<2x32xf32>
    %25 = vector.extract_strided_slice %21 {offsets = [0, 96], sizes = [2, 32], strides = [1, 1]} : vector<2x128xf32> to vector<2x32xf32>
    %26 = arith.mulf %23, %14 : vector<2x32xf32>
    %27 = arith.mulf %22, %24 : vector<2x32xf32>
    %28 = arith.addf %26, %27 : vector<2x32xf32>
    %29 = math.tanh %28 : vector<2x32xf32>
    %30 = arith.mulf %25, %29 : vector<2x32xf32>
    %c0_17 = arith.constant 0 : index
    %c0_18 = arith.constant 0 : index
    %31 = vector.load %arg11[%c0_17, %c0_18] : memref<16x32xf32, #tpu.memory_space<vmem>>, vector<2x32xf32>
    tpu.vector_store %arg11[%c0_17, %c0_18], %30 {strides = array<i32>} : memref<16x32xf32, #tpu.memory_space<vmem>>, vector<2x32xf32>,
    %c2 = arith.constant 2 : index
    %c0_19 = arith.constant 0 : index
    %32 = vector.load %arg10[%c2, %c0_19] : memref<16x128xf32, #tpu.memory_space<vmem>>, vector<2x128xf32>
    %cst_20 = arith.constant dense<0.000000e+00> : vector<2x128xf32>
    %33 = tpu.matmul %30, %12, %cst_20 {dimension_numbers = #tpu.dot_dimension_numbers<[1], [0], [0], [1], [0, 0, 1, 1], [], []>} : vector<2x32xf32>, vector<32x128xf32>, vector<2x128xf32> -> vector<2x128xf32>
    %34 = arith.addf %32, %33 : vector<2x128xf32>
    %35 = arith.mulf %3, %34 : vector<2x128xf32>
    %36 = math.tanh %35 : vector<2x128xf32>
    %37 = arith.mulf %3, %36 : vector<2x128xf32>
    %38 = arith.addf %37, %4 : vector<2x128xf32>
    %39 = vector.extract_strided_slice %38 {offsets = [0, 0], sizes = [2, 32], strides = [1, 1]} : vector<2x128xf32> to vector<2x32xf32>
    %40 = vector.extract_strided_slice %38 {offsets = [0, 32], sizes = [2, 32], strides = [1, 1]} : vector<2x128xf32> to vector<2x32xf32>
    %41 = vector.extract_strided_slice %38 {offsets = [0, 64], sizes = [2, 32], strides = [1, 1]} : vector<2x128xf32> to vector<2x32xf32>
    %42 = vector.extract_strided_slice %38 {offsets = [0, 96], sizes = [2, 32], strides = [1, 1]} : vector<2x128xf32> to vector<2x32xf32>
    %43 = arith.mulf %40, %28 : vector<2x32xf32>
    %44 = arith.mulf %39, %41 : vector<2x32xf32>
    %45 = arith.addf %43, %44 : vector<2x32xf32>
    %46 = math.tanh %45 : vector<2x32xf32>
    %47 = arith.mulf %42, %46 : vector<2x32xf32>
    %c2_21 = arith.constant 2 : index
    %c0_22 = arith.constant 0 : index
    %48 = vector.load %arg11[%c2_21, %c0_22] : memref<16x32xf32, #tpu.memory_space<vmem>>, vector<2x32xf32>
    tpu.vector_store %arg11[%c2_21, %c0_22], %47 {strides = array<i32>} : memref<16x32xf32, #tpu.memory_space<vmem>>, vector<2x32xf32>,
    %c4 = arith.constant 4 : index
    %c0_23 = arith.constant 0 : index
    %49 = vector.load %arg10[%c4, %c0_23] : memref<16x128xf32, #tpu.memory_space<vmem>>, vector<2x128xf32>
    %cst_24 = arith.constant dense<0.000000e+00> : vector<2x128xf32>
    %50 = tpu.matmul %47, %12, %cst_24 {dimension_numbers = #tpu.dot_dimension_numbers<[1], [0], [0], [1], [0, 0, 1, 1], [], []>} : vector<2x32xf32>, vector<32x128xf32>, vector<2x128xf32> -> vector<2x128xf32>
    %51 = arith.addf %49, %50 : vector<2x128xf32>
    %52 = arith.mulf %3, %51 : vector<2x128xf32>
    %53 = math.tanh %52 : vector<2x128xf32>
    %54 = arith.mulf %3, %53 : vector<2x128xf32>
    %55 = arith.addf %54, %4 : vector<2x128xf32>
    %56 = vector.extract_strided_slice %55 {offsets = [0, 0], sizes = [2, 32], strides = [1, 1]} : vector<2x128xf32> to vector<2x32xf32>
    %57 = vector.extract_strided_slice %55 {offsets = [0, 32], sizes = [2, 32], strides = [1, 1]} : vector<2x128xf32> to vector<2x32xf32>
    %58 = vector.extract_strided_slice %55 {offsets = [0, 64], sizes = [2, 32], strides = [1, 1]} : vector<2x128xf32> to vector<2x32xf32>
    %59 = vector.extract_strided_slice %55 {offsets = [0, 96], sizes = [2, 32], strides = [1, 1]} : vector<2x128xf32> to vector<2x32xf32>
    %60 = arith.mulf %57, %45 : vector<2x32xf32>
    %61 = arith.mulf %56, %58 : vector<2x32xf32>
    %62 = arith.addf %60, %61 : vector<2x32xf32>
    %63 = math.tanh %62 : vector<2x32xf32>
    %64 = arith.mulf %59, %63 : vector<2x32xf32>
    %c4_25 = arith.constant 4 : index
    %c0_26 = arith.constant 0 : index
    %65 = vector.load %arg11[%c4_25, %c0_26] : memref<16x32xf32, #tpu.memory_space<vmem>>, vector<2x32xf32>
    tpu.vector_store %arg11[%c4_25, %c0_26], %64 {strides = array<i32>} : memref<16x32xf32, #tpu.memory_space<vmem>>, vector<2x32xf32>,
    %c6 = arith.constant 6 : index
    %c0_27 = arith.constant 0 : index
    %66 = vector.load %arg10[%c6, %c0_27] : memref<16x128xf32, #tpu.memory_space<vmem>>, vector<2x128xf32>
    %cst_28 = arith.constant dense<0.000000e+00> : vector<2x128xf32>
    %67 = tpu.matmul %64, %12, %cst_28 {dimension_numbers = #tpu.dot_dimension_numbers<[1], [0], [0], [1], [0, 0, 1, 1], [], []>} : vector<2x32xf32>, vector<32x128xf32>, vector<2x128xf32> -> vector<2x128xf32>
    %68 = arith.addf %66, %67 : vector<2x128xf32>
    %69 = arith.mulf %3, %68 : vector<2x128xf32>
    %70 = math.tanh %69 : vector<2x128xf32>
    %71 = arith.mulf %3, %70 : vector<2x128xf32>
    %72 = arith.addf %71, %4 : vector<2x128xf32>
    %73 = vector.extract_strided_slice %72 {offsets = [0, 0], sizes = [2, 32], strides = [1, 1]} : vector<2x128xf32> to vector<2x32xf32>
    %74 = vector.extract_strided_slice %72 {offsets = [0, 32], sizes = [2, 32], strides = [1, 1]} : vector<2x128xf32> to vector<2x32xf32>
    %75 = vector.extract_strided_slice %72 {offsets = [0, 64], sizes = [2, 32], strides = [1, 1]} : vector<2x128xf32> to vector<2x32xf32>
    %76 = vector.extract_strided_slice %72 {offsets = [0, 96], sizes = [2, 32], strides = [1, 1]} : vector<2x128xf32> to vector<2x32xf32>
    %77 = arith.mulf %74, %62 : vector<2x32xf32>
    %78 = arith.mulf %73, %75 : vector<2x32xf32>
    %79 = arith.addf %77, %78 : vector<2x32xf32>
    %80 = math.tanh %79 : vector<2x32xf32>
    %81 = arith.mulf %76, %80 : vector<2x32xf32>
    %c6_29 = arith.constant 6 : index
    %c0_30 = arith.constant 0 : index
    %82 = vector.load %arg11[%c6_29, %c0_30] : memref<16x32xf32, #tpu.memory_space<vmem>>, vector<2x32xf32>
    tpu.vector_store %arg11[%c6_29, %c0_30], %81 {strides = array<i32>} : memref<16x32xf32, #tpu.memory_space<vmem>>, vector<2x32xf32>,
    %c8 = arith.constant 8 : index
    %c0_31 = arith.constant 0 : index
    %83 = vector.load %arg10[%c8, %c0_31] : memref<16x128xf32, #tpu.memory_space<vmem>>, vector<2x128xf32>
    %cst_32 = arith.constant dense<0.000000e+00> : vector<2x128xf32>
    %84 = tpu.matmul %81, %12, %cst_32 {dimension_numbers = #tpu.dot_dimension_numbers<[1], [0], [0], [1], [0, 0, 1, 1], [], []>} : vector<2x32xf32>, vector<32x128xf32>, vector<2x128xf32> -> vector<2x128xf32>
    %85 = arith.addf %83, %84 : vector<2x128xf32>
    %86 = arith.mulf %3, %85 : vector<2x128xf32>
    %87 = math.tanh %86 : vector<2x128xf32>
    %88 = arith.mulf %3, %87 : vector<2x128xf32>
    %89 = arith.addf %88, %4 : vector<2x128xf32>
    %90 = vector.extract_strided_slice %89 {offsets = [0, 0], sizes = [2, 32], strides = [1, 1]} : vector<2x128xf32> to vector<2x32xf32>
    %91 = vector.extract_strided_slice %89 {offsets = [0, 32], sizes = [2, 32], strides = [1, 1]} : vector<2x128xf32> to vector<2x32xf32>
    %92 = vector.extract_strided_slice %89 {offsets = [0, 64], sizes = [2, 32], strides = [1, 1]} : vector<2x128xf32> to vector<2x32xf32>
    %93 = vector.extract_strided_slice %89 {offsets = [0, 96], sizes = [2, 32], strides = [1, 1]} : vector<2x128xf32> to vector<2x32xf32>
    %94 = arith.mulf %91, %79 : vector<2x32xf32>
    %95 = arith.mulf %90, %92 : vector<2x32xf32>
    %96 = arith.addf %94, %95 : vector<2x32xf32>
    %97 = math.tanh %96 : vector<2x32xf32>
    %98 = arith.mulf %93, %97 : vector<2x32xf32>
    %c8_33 = arith.constant 8 : index
    %c0_34 = arith.constant 0 : index
    %99 = vector.load %arg11[%c8_33, %c0_34] : memref<16x32xf32, #tpu.memory_space<vmem>>, vector<2x32xf32>
    tpu.vector_store %arg11[%c8_33, %c0_34], %98 {strides = array<i32>} : memref<16x32xf32, #tpu.memory_space<vmem>>, vector<2x32xf32>,
    %c10 = arith.constant 10 : index
    %c0_35 = arith.constant 0 : index
    %100 = vector.load %arg10[%c10, %c0_35] : memref<16x128xf32, #tpu.memory_space<vmem>>, vector<2x128xf32>
    %cst_36 = arith.constant dense<0.000000e+00> : vector<2x128xf32>
    %101 = tpu.matmul %98, %12, %cst_36 {dimension_numbers = #tpu.dot_dimension_numbers<[1], [0], [0], [1], [0, 0, 1, 1], [], []>} : vector<2x32xf32>, vector<32x128xf32>, vector<2x128xf32> -> vector<2x128xf32>
    %102 = arith.addf %100, %101 : vector<2x128xf32>
    %103 = arith.mulf %3, %102 : vector<2x128xf32>
    %104 = math.tanh %103 : vector<2x128xf32>
    %105 = arith.mulf %3, %104 : vector<2x128xf32>
    %106 = arith.addf %105, %4 : vector<2x128xf32>
    %107 = vector.extract_strided_slice %106 {offsets = [0, 0], sizes = [2, 32], strides = [1, 1]} : vector<2x128xf32> to vector<2x32xf32>
    %108 = vector.extract_strided_slice %106 {offsets = [0, 32], sizes = [2, 32], strides = [1, 1]} : vector<2x128xf32> to vector<2x32xf32>
    %109 = vector.extract_strided_slice %106 {offsets = [0, 64], sizes = [2, 32], strides = [1, 1]} : vector<2x128xf32> to vector<2x32xf32>
    %110 = vector.extract_strided_slice %106 {offsets = [0, 96], sizes = [2, 32], strides = [1, 1]} : vector<2x128xf32> to vector<2x32xf32>
    %111 = arith.mulf %108, %96 : vector<2x32xf32>
    %112 = arith.mulf %107, %109 : vector<2x32xf32>
    %113 = arith.addf %111, %112 : vector<2x32xf32>
    %114 = math.tanh %113 : vector<2x32xf32>
    %115 = arith.mulf %110, %114 : vector<2x32xf32>
    %c10_37 = arith.constant 10 : index
    %c0_38 = arith.constant 0 : index
    %116 = vector.load %arg11[%c10_37, %c0_38] : memref<16x32xf32, #tpu.memory_space<vmem>>, vector<2x32xf32>
    tpu.vector_store %arg11[%c10_37, %c0_38], %115 {strides = array<i32>} : memref<16x32xf32, #tpu.memory_space<vmem>>, vector<2x32xf32>,
    %c12 = arith.constant 12 : index
    %c0_39 = arith.constant 0 : index
    %117 = vector.load %arg10[%c12, %c0_39] : memref<16x128xf32, #tpu.memory_space<vmem>>, vector<2x128xf32>
    %cst_40 = arith.constant dense<0.000000e+00> : vector<2x128xf32>
    %118 = tpu.matmul %115, %12, %cst_40 {dimension_numbers = #tpu.dot_dimension_numbers<[1], [0], [0], [1], [0, 0, 1, 1], [], []>} : vector<2x32xf32>, vector<32x128xf32>, vector<2x128xf32> -> vector<2x128xf32>
    %119 = arith.addf %117, %118 : vector<2x128xf32>
    %120 = arith.mulf %3, %119 : vector<2x128xf32>
    %121 = math.tanh %120 : vector<2x128xf32>
    %122 = arith.mulf %3, %121 : vector<2x128xf32>
    %123 = arith.addf %122, %4 : vector<2x128xf32>
    %124 = vector.extract_strided_slice %123 {offsets = [0, 0], sizes = [2, 32], strides = [1, 1]} : vector<2x128xf32> to vector<2x32xf32>
    %125 = vector.extract_strided_slice %123 {offsets = [0, 32], sizes = [2, 32], strides = [1, 1]} : vector<2x128xf32> to vector<2x32xf32>
    %126 = vector.extract_strided_slice %123 {offsets = [0, 64], sizes = [2, 32], strides = [1, 1]} : vector<2x128xf32> to vector<2x32xf32>
    %127 = vector.extract_strided_slice %123 {offsets = [0, 96], sizes = [2, 32], strides = [1, 1]} : vector<2x128xf32> to vector<2x32xf32>
    %128 = arith.mulf %125, %113 : vector<2x32xf32>
    %129 = arith.mulf %124, %126 : vector<2x32xf32>
    %130 = arith.addf %128, %129 : vector<2x32xf32>
    %131 = math.tanh %130 : vector<2x32xf32>
    %132 = arith.mulf %127, %131 : vector<2x32xf32>
    %c12_41 = arith.constant 12 : index
    %c0_42 = arith.constant 0 : index
    %133 = vector.load %arg11[%c12_41, %c0_42] : memref<16x32xf32, #tpu.memory_space<vmem>>, vector<2x32xf32>
    tpu.vector_store %arg11[%c12_41, %c0_42], %132 {strides = array<i32>} : memref<16x32xf32, #tpu.memory_space<vmem>>, vector<2x32xf32>,
    %c14 = arith.constant 14 : index
    %c0_43 = arith.constant 0 : index
    %134 = vector.load %arg10[%c14, %c0_43] : memref<16x128xf32, #tpu.memory_space<vmem>>, vector<2x128xf32>
    %cst_44 = arith.constant dense<0.000000e+00> : vector<2x128xf32>
    %135 = tpu.matmul %132, %12, %cst_44 {dimension_numbers = #tpu.dot_dimension_numbers<[1], [0], [0], [1], [0, 0, 1, 1], [], []>} : vector<2x32xf32>, vector<32x128xf32>, vector<2x128xf32> -> vector<2x128xf32>
    %136 = arith.addf %134, %135 : vector<2x128xf32>
    %137 = arith.mulf %3, %136 : vector<2x128xf32>
    %138 = math.tanh %137 : vector<2x128xf32>
    %139 = arith.mulf %3, %138 : vector<2x128xf32>
    %140 = arith.addf %139, %4 : vector<2x128xf32>
    %141 = vector.extract_strided_slice %140 {offsets = [0, 0], sizes = [2, 32], strides = [1, 1]} : vector<2x128xf32> to vector<2x32xf32>
    %142 = vector.extract_strided_slice %140 {offsets = [0, 32], sizes = [2, 32], strides = [1, 1]} : vector<2x128xf32> to vector<2x32xf32>
    %143 = vector.extract_strided_slice %140 {offsets = [0, 64], sizes = [2, 32], strides = [1, 1]} : vector<2x128xf32> to vector<2x32xf32>
    %144 = vector.extract_strided_slice %140 {offsets = [0, 96], sizes = [2, 32], strides = [1, 1]} : vector<2x128xf32> to vector<2x32xf32>
    %145 = arith.mulf %142, %130 : vector<2x32xf32>
    %146 = arith.mulf %141, %143 : vector<2x32xf32>
    %147 = arith.addf %145, %146 : vector<2x32xf32>
    %148 = math.tanh %147 : vector<2x32xf32>
    %149 = arith.mulf %144, %148 : vector<2x32xf32>
    %c14_45 = arith.constant 14 : index
    %c0_46 = arith.constant 0 : index
    %150 = vector.load %arg11[%c14_45, %c0_46] : memref<16x32xf32, #tpu.memory_space<vmem>>, vector<2x32xf32>
    tpu.vector_store %arg11[%c14_45, %c0_46], %149 {strides = array<i32>} : memref<16x32xf32, #tpu.memory_space<vmem>>, vector<2x32xf32>,
    %c0_47 = arith.constant 0 : index
    %c0_48 = arith.constant 0 : index
    %151 = vector.load %arg11[%c0_47, %c0_48] : memref<16x32xf32, #tpu.memory_space<vmem>>, vector<16x32xf32>
    %c0_49 = arith.constant 0 : index
    %c0_50 = arith.constant 0 : index
    %152 = vector.load %arg5[%c0_49, %c0_50] : memref<32x128xf32, #tpu.memory_space<vmem>>, vector<32x128xf32>
    %cst_51 = arith.constant dense<0.000000e+00> : vector<16x128xf32>
    %153 = tpu.matmul %151, %152, %cst_51 {dimension_numbers = #tpu.dot_dimension_numbers<[1], [0], [0], [1], [0, 0, 1, 1], [], []>} : vector<16x32xf32>, vector<32x128xf32>, vector<16x128xf32> -> vector<16x128xf32>
    %c0_52 = arith.constant 0 : index
    %c0_53 = arith.constant 0 : index
    %154 = vector.load %arg7[%c0_52, %c0_53] : memref<1x128xf32, #tpu.memory_space<vmem>>, vector<1x128xf32>
    %155 = vector.broadcast %154 : vector<1x128xf32> to vector<16x128xf32>
    %156 = arith.addf %153, %155 : vector<16x128xf32>
    %c0_54 = arith.constant 0 : index
    %c0_55 = arith.constant 0 : index
    %157 = vector.load %arg10[%c0_54, %c0_55] : memref<16x128xf32, #tpu.memory_space<vmem>>, vector<16x128xf32>
    tpu.vector_store %arg10[%c0_54, %c0_55], %156 {strides = array<i32>} : memref<16x128xf32, #tpu.memory_space<vmem>>, vector<16x128xf32>,
    %c0_56 = arith.constant 0 : index
    %c0_57 = arith.constant 0 : index
    %158 = vector.load %arg6[%c0_56, %c0_57] : memref<32x128xf32, #tpu.memory_space<vmem>>, vector<32x128xf32>
    %cst_58 = arith.constant 0.000000e+00 : f32
    %159 = vector.broadcast %cst_58 : f32 to vector<2x32xf32>
    %cst_59 = arith.constant 0.000000e+00 : f32
    %160 = vector.broadcast %cst_59 : f32 to vector<2x32xf32>
    %c0_60 = arith.constant 0 : index
    %c0_61 = arith.constant 0 : index
    %161 = vector.load %arg10[%c0_60, %c0_61] : memref<16x128xf32, #tpu.memory_space<vmem>>, vector<2x128xf32>
    %cst_62 = arith.constant dense<0.000000e+00> : vector<2x128xf32>
    %162 = tpu.matmul %159, %158, %cst_62 {dimension_numbers = #tpu.dot_dimension_numbers<[1], [0], [0], [1], [0, 0, 1, 1], [], []>} : vector<2x32xf32>, vector<32x128xf32>, vector<2x128xf32> -> vector<2x128xf32>
    %163 = arith.addf %161, %162 : vector<2x128xf32>
    %164 = arith.mulf %3, %163 : vector<2x128xf32>
    %165 = math.tanh %164 : vector<2x128xf32>
    %166 = arith.mulf %3, %165 : vector<2x128xf32>
    %167 = arith.addf %166, %4 : vector<2x128xf32>
    %168 = vector.extract_strided_slice %167 {offsets = [0, 0], sizes = [2, 32], strides = [1, 1]} : vector<2x128xf32> to vector<2x32xf32>
    %169 = vector.extract_strided_slice %167 {offsets = [0, 32], sizes = [2, 32], strides = [1, 1]} : vector<2x128xf32> to vector<2x32xf32>
    %170 = vector.extract_strided_slice %167 {offsets = [0, 64], sizes = [2, 32], strides = [1, 1]} : vector<2x128xf32> to vector<2x32xf32>
    %171 = vector.extract_strided_slice %167 {offsets = [0, 96], sizes = [2, 32], strides = [1, 1]} : vector<2x128xf32> to vector<2x32xf32>
    %172 = arith.mulf %169, %160 : vector<2x32xf32>
    %173 = arith.mulf %168, %170 : vector<2x32xf32>
    %174 = arith.addf %172, %173 : vector<2x32xf32>
    %175 = math.tanh %174 : vector<2x32xf32>
    %176 = arith.mulf %171, %175 : vector<2x32xf32>
    %c0_63 = arith.constant 0 : index
    %c0_64 = arith.constant 0 : index
    %177 = vector.load %arg11[%c0_63, %c0_64] : memref<16x32xf32, #tpu.memory_space<vmem>>, vector<2x32xf32>
    tpu.vector_store %arg11[%c0_63, %c0_64], %176 {strides = array<i32>} : memref<16x32xf32, #tpu.memory_space<vmem>>, vector<2x32xf32>,
    %c2_65 = arith.constant 2 : index
    %c0_66 = arith.constant 0 : index
    %178 = vector.load %arg10[%c2_65, %c0_66] : memref<16x128xf32, #tpu.memory_space<vmem>>, vector<2x128xf32>
    %cst_67 = arith.constant dense<0.000000e+00> : vector<2x128xf32>
    %179 = tpu.matmul %176, %158, %cst_67 {dimension_numbers = #tpu.dot_dimension_numbers<[1], [0], [0], [1], [0, 0, 1, 1], [], []>} : vector<2x32xf32>, vector<32x128xf32>, vector<2x128xf32> -> vector<2x128xf32>
    %180 = arith.addf %178, %179 : vector<2x128xf32>
    %181 = arith.mulf %3, %180 : vector<2x128xf32>
    %182 = math.tanh %181 : vector<2x128xf32>
    %183 = arith.mulf %3, %182 : vector<2x128xf32>
    %184 = arith.addf %183, %4 : vector<2x128xf32>
    %185 = vector.extract_strided_slice %184 {offsets = [0, 0], sizes = [2, 32], strides = [1, 1]} : vector<2x128xf32> to vector<2x32xf32>
    %186 = vector.extract_strided_slice %184 {offsets = [0, 32], sizes = [2, 32], strides = [1, 1]} : vector<2x128xf32> to vector<2x32xf32>
    %187 = vector.extract_strided_slice %184 {offsets = [0, 64], sizes = [2, 32], strides = [1, 1]} : vector<2x128xf32> to vector<2x32xf32>
    %188 = vector.extract_strided_slice %184 {offsets = [0, 96], sizes = [2, 32], strides = [1, 1]} : vector<2x128xf32> to vector<2x32xf32>
    %189 = arith.mulf %186, %174 : vector<2x32xf32>
    %190 = arith.mulf %185, %187 : vector<2x32xf32>
    %191 = arith.addf %189, %190 : vector<2x32xf32>
    %192 = math.tanh %191 : vector<2x32xf32>
    %193 = arith.mulf %188, %192 : vector<2x32xf32>
    %c2_68 = arith.constant 2 : index
    %c0_69 = arith.constant 0 : index
    %194 = vector.load %arg11[%c2_68, %c0_69] : memref<16x32xf32, #tpu.memory_space<vmem>>, vector<2x32xf32>
    tpu.vector_store %arg11[%c2_68, %c0_69], %193 {strides = array<i32>} : memref<16x32xf32, #tpu.memory_space<vmem>>, vector<2x32xf32>,
    %c4_70 = arith.constant 4 : index
    %c0_71 = arith.constant 0 : index
    %195 = vector.load %arg10[%c4_70, %c0_71] : memref<16x128xf32, #tpu.memory_space<vmem>>, vector<2x128xf32>
    %cst_72 = arith.constant dense<0.000000e+00> : vector<2x128xf32>
    %196 = tpu.matmul %193, %158, %cst_72 {dimension_numbers = #tpu.dot_dimension_numbers<[1], [0], [0], [1], [0, 0, 1, 1], [], []>} : vector<2x32xf32>, vector<32x128xf32>, vector<2x128xf32> -> vector<2x128xf32>
    %197 = arith.addf %195, %196 : vector<2x128xf32>
    %198 = arith.mulf %3, %197 : vector<2x128xf32>
    %199 = math.tanh %198 : vector<2x128xf32>
    %200 = arith.mulf %3, %199 : vector<2x128xf32>
    %201 = arith.addf %200, %4 : vector<2x128xf32>
    %202 = vector.extract_strided_slice %201 {offsets = [0, 0], sizes = [2, 32], strides = [1, 1]} : vector<2x128xf32> to vector<2x32xf32>
    %203 = vector.extract_strided_slice %201 {offsets = [0, 32], sizes = [2, 32], strides = [1, 1]} : vector<2x128xf32> to vector<2x32xf32>
    %204 = vector.extract_strided_slice %201 {offsets = [0, 64], sizes = [2, 32], strides = [1, 1]} : vector<2x128xf32> to vector<2x32xf32>
    %205 = vector.extract_strided_slice %201 {offsets = [0, 96], sizes = [2, 32], strides = [1, 1]} : vector<2x128xf32> to vector<2x32xf32>
    %206 = arith.mulf %203, %191 : vector<2x32xf32>
    %207 = arith.mulf %202, %204 : vector<2x32xf32>
    %208 = arith.addf %206, %207 : vector<2x32xf32>
    %209 = math.tanh %208 : vector<2x32xf32>
    %210 = arith.mulf %205, %209 : vector<2x32xf32>
    %c4_73 = arith.constant 4 : index
    %c0_74 = arith.constant 0 : index
    %211 = vector.load %arg11[%c4_73, %c0_74] : memref<16x32xf32, #tpu.memory_space<vmem>>, vector<2x32xf32>
    tpu.vector_store %arg11[%c4_73, %c0_74], %210 {strides = array<i32>} : memref<16x32xf32, #tpu.memory_space<vmem>>, vector<2x32xf32>,
    %c6_75 = arith.constant 6 : index
    %c0_76 = arith.constant 0 : index
    %212 = vector.load %arg10[%c6_75, %c0_76] : memref<16x128xf32, #tpu.memory_space<vmem>>, vector<2x128xf32>
    %cst_77 = arith.constant dense<0.000000e+00> : vector<2x128xf32>
    %213 = tpu.matmul %210, %158, %cst_77 {dimension_numbers = #tpu.dot_dimension_numbers<[1], [0], [0], [1], [0, 0, 1, 1], [], []>} : vector<2x32xf32>, vector<32x128xf32>, vector<2x128xf32> -> vector<2x128xf32>
    %214 = arith.addf %212, %213 : vector<2x128xf32>
    %215 = arith.mulf %3, %214 : vector<2x128xf32>
    %216 = math.tanh %215 : vector<2x128xf32>
    %217 = arith.mulf %3, %216 : vector<2x128xf32>
    %218 = arith.addf %217, %4 : vector<2x128xf32>
    %219 = vector.extract_strided_slice %218 {offsets = [0, 0], sizes = [2, 32], strides = [1, 1]} : vector<2x128xf32> to vector<2x32xf32>
    %220 = vector.extract_strided_slice %218 {offsets = [0, 32], sizes = [2, 32], strides = [1, 1]} : vector<2x128xf32> to vector<2x32xf32>
    %221 = vector.extract_strided_slice %218 {offsets = [0, 64], sizes = [2, 32], strides = [1, 1]} : vector<2x128xf32> to vector<2x32xf32>
    %222 = vector.extract_strided_slice %218 {offsets = [0, 96], sizes = [2, 32], strides = [1, 1]} : vector<2x128xf32> to vector<2x32xf32>
    %223 = arith.mulf %220, %208 : vector<2x32xf32>
    %224 = arith.mulf %219, %221 : vector<2x32xf32>
    %225 = arith.addf %223, %224 : vector<2x32xf32>
    %226 = math.tanh %225 : vector<2x32xf32>
    %227 = arith.mulf %222, %226 : vector<2x32xf32>
    %c6_78 = arith.constant 6 : index
    %c0_79 = arith.constant 0 : index
    %228 = vector.load %arg11[%c6_78, %c0_79] : memref<16x32xf32, #tpu.memory_space<vmem>>, vector<2x32xf32>
    tpu.vector_store %arg11[%c6_78, %c0_79], %227 {strides = array<i32>} : memref<16x32xf32, #tpu.memory_space<vmem>>, vector<2x32xf32>,
    %c8_80 = arith.constant 8 : index
    %c0_81 = arith.constant 0 : index
    %229 = vector.load %arg10[%c8_80, %c0_81] : memref<16x128xf32, #tpu.memory_space<vmem>>, vector<2x128xf32>
    %cst_82 = arith.constant dense<0.000000e+00> : vector<2x128xf32>
    %230 = tpu.matmul %227, %158, %cst_82 {dimension_numbers = #tpu.dot_dimension_numbers<[1], [0], [0], [1], [0, 0, 1, 1], [], []>} : vector<2x32xf32>, vector<32x128xf32>, vector<2x128xf32> -> vector<2x128xf32>
    %231 = arith.addf %229, %230 : vector<2x128xf32>
    %232 = arith.mulf %3, %231 : vector<2x128xf32>
    %233 = math.tanh %232 : vector<2x128xf32>
    %234 = arith.mulf %3, %233 : vector<2x128xf32>
    %235 = arith.addf %234, %4 : vector<2x128xf32>
    %236 = vector.extract_strided_slice %235 {offsets = [0, 0], sizes = [2, 32], strides = [1, 1]} : vector<2x128xf32> to vector<2x32xf32>
    %237 = vector.extract_strided_slice %235 {offsets = [0, 32], sizes = [2, 32], strides = [1, 1]} : vector<2x128xf32> to vector<2x32xf32>
    %238 = vector.extract_strided_slice %235 {offsets = [0, 64], sizes = [2, 32], strides = [1, 1]} : vector<2x128xf32> to vector<2x32xf32>
    %239 = vector.extract_strided_slice %235 {offsets = [0, 96], sizes = [2, 32], strides = [1, 1]} : vector<2x128xf32> to vector<2x32xf32>
    %240 = arith.mulf %237, %225 : vector<2x32xf32>
    %241 = arith.mulf %236, %238 : vector<2x32xf32>
    %242 = arith.addf %240, %241 : vector<2x32xf32>
    %243 = math.tanh %242 : vector<2x32xf32>
    %244 = arith.mulf %239, %243 : vector<2x32xf32>
    %c8_83 = arith.constant 8 : index
    %c0_84 = arith.constant 0 : index
    %245 = vector.load %arg11[%c8_83, %c0_84] : memref<16x32xf32, #tpu.memory_space<vmem>>, vector<2x32xf32>
    tpu.vector_store %arg11[%c8_83, %c0_84], %244 {strides = array<i32>} : memref<16x32xf32, #tpu.memory_space<vmem>>, vector<2x32xf32>,
    %c10_85 = arith.constant 10 : index
    %c0_86 = arith.constant 0 : index
    %246 = vector.load %arg10[%c10_85, %c0_86] : memref<16x128xf32, #tpu.memory_space<vmem>>, vector<2x128xf32>
    %cst_87 = arith.constant dense<0.000000e+00> : vector<2x128xf32>
    %247 = tpu.matmul %244, %158, %cst_87 {dimension_numbers = #tpu.dot_dimension_numbers<[1], [0], [0], [1], [0, 0, 1, 1], [], []>} : vector<2x32xf32>, vector<32x128xf32>, vector<2x128xf32> -> vector<2x128xf32>
    %248 = arith.addf %246, %247 : vector<2x128xf32>
    %249 = arith.mulf %3, %248 : vector<2x128xf32>
    %250 = math.tanh %249 : vector<2x128xf32>
    %251 = arith.mulf %3, %250 : vector<2x128xf32>
    %252 = arith.addf %251, %4 : vector<2x128xf32>
    %253 = vector.extract_strided_slice %252 {offsets = [0, 0], sizes = [2, 32], strides = [1, 1]} : vector<2x128xf32> to vector<2x32xf32>
    %254 = vector.extract_strided_slice %252 {offsets = [0, 32], sizes = [2, 32], strides = [1, 1]} : vector<2x128xf32> to vector<2x32xf32>
    %255 = vector.extract_strided_slice %252 {offsets = [0, 64], sizes = [2, 32], strides = [1, 1]} : vector<2x128xf32> to vector<2x32xf32>
    %256 = vector.extract_strided_slice %252 {offsets = [0, 96], sizes = [2, 32], strides = [1, 1]} : vector<2x128xf32> to vector<2x32xf32>
    %257 = arith.mulf %254, %242 : vector<2x32xf32>
    %258 = arith.mulf %253, %255 : vector<2x32xf32>
    %259 = arith.addf %257, %258 : vector<2x32xf32>
    %260 = math.tanh %259 : vector<2x32xf32>
    %261 = arith.mulf %256, %260 : vector<2x32xf32>
    %c10_88 = arith.constant 10 : index
    %c0_89 = arith.constant 0 : index
    %262 = vector.load %arg11[%c10_88, %c0_89] : memref<16x32xf32, #tpu.memory_space<vmem>>, vector<2x32xf32>
    tpu.vector_store %arg11[%c10_88, %c0_89], %261 {strides = array<i32>} : memref<16x32xf32, #tpu.memory_space<vmem>>, vector<2x32xf32>,
    %c12_90 = arith.constant 12 : index
    %c0_91 = arith.constant 0 : index
    %263 = vector.load %arg10[%c12_90, %c0_91] : memref<16x128xf32, #tpu.memory_space<vmem>>, vector<2x128xf32>
    %cst_92 = arith.constant dense<0.000000e+00> : vector<2x128xf32>
    %264 = tpu.matmul %261, %158, %cst_92 {dimension_numbers = #tpu.dot_dimension_numbers<[1], [0], [0], [1], [0, 0, 1, 1], [], []>} : vector<2x32xf32>, vector<32x128xf32>, vector<2x128xf32> -> vector<2x128xf32>
    %265 = arith.addf %263, %264 : vector<2x128xf32>
    %266 = arith.mulf %3, %265 : vector<2x128xf32>
    %267 = math.tanh %266 : vector<2x128xf32>
    %268 = arith.mulf %3, %267 : vector<2x128xf32>
    %269 = arith.addf %268, %4 : vector<2x128xf32>
    %270 = vector.extract_strided_slice %269 {offsets = [0, 0], sizes = [2, 32], strides = [1, 1]} : vector<2x128xf32> to vector<2x32xf32>
    %271 = vector.extract_strided_slice %269 {offsets = [0, 32], sizes = [2, 32], strides = [1, 1]} : vector<2x128xf32> to vector<2x32xf32>
    %272 = vector.extract_strided_slice %269 {offsets = [0, 64], sizes = [2, 32], strides = [1, 1]} : vector<2x128xf32> to vector<2x32xf32>
    %273 = vector.extract_strided_slice %269 {offsets = [0, 96], sizes = [2, 32], strides = [1, 1]} : vector<2x128xf32> to vector<2x32xf32>
    %274 = arith.mulf %271, %259 : vector<2x32xf32>
    %275 = arith.mulf %270, %272 : vector<2x32xf32>
    %276 = arith.addf %274, %275 : vector<2x32xf32>
    %277 = math.tanh %276 : vector<2x32xf32>
    %278 = arith.mulf %273, %277 : vector<2x32xf32>
    %c12_93 = arith.constant 12 : index
    %c0_94 = arith.constant 0 : index
    %279 = vector.load %arg11[%c12_93, %c0_94] : memref<16x32xf32, #tpu.memory_space<vmem>>, vector<2x32xf32>
    tpu.vector_store %arg11[%c12_93, %c0_94], %278 {strides = array<i32>} : memref<16x32xf32, #tpu.memory_space<vmem>>, vector<2x32xf32>,
    %c14_95 = arith.constant 14 : index
    %c0_96 = arith.constant 0 : index
    %280 = vector.load %arg10[%c14_95, %c0_96] : memref<16x128xf32, #tpu.memory_space<vmem>>, vector<2x128xf32>
    %cst_97 = arith.constant dense<0.000000e+00> : vector<2x128xf32>
    %281 = tpu.matmul %278, %158, %cst_97 {dimension_numbers = #tpu.dot_dimension_numbers<[1], [0], [0], [1], [0, 0, 1, 1], [], []>} : vector<2x32xf32>, vector<32x128xf32>, vector<2x128xf32> -> vector<2x128xf32>
    %282 = arith.addf %280, %281 : vector<2x128xf32>
    %283 = arith.mulf %3, %282 : vector<2x128xf32>
    %284 = math.tanh %283 : vector<2x128xf32>
    %285 = arith.mulf %3, %284 : vector<2x128xf32>
    %286 = arith.addf %285, %4 : vector<2x128xf32>
    %287 = vector.extract_strided_slice %286 {offsets = [0, 0], sizes = [2, 32], strides = [1, 1]} : vector<2x128xf32> to vector<2x32xf32>
    %288 = vector.extract_strided_slice %286 {offsets = [0, 32], sizes = [2, 32], strides = [1, 1]} : vector<2x128xf32> to vector<2x32xf32>
    %289 = vector.extract_strided_slice %286 {offsets = [0, 64], sizes = [2, 32], strides = [1, 1]} : vector<2x128xf32> to vector<2x32xf32>
    %290 = vector.extract_strided_slice %286 {offsets = [0, 96], sizes = [2, 32], strides = [1, 1]} : vector<2x128xf32> to vector<2x32xf32>
    %291 = arith.mulf %288, %276 : vector<2x32xf32>
    %292 = arith.mulf %287, %289 : vector<2x32xf32>
    %293 = arith.addf %291, %292 : vector<2x32xf32>
    %294 = math.tanh %293 : vector<2x32xf32>
    %295 = arith.mulf %290, %294 : vector<2x32xf32>
    %c14_98 = arith.constant 14 : index
    %c0_99 = arith.constant 0 : index
    %296 = vector.load %arg11[%c14_98, %c0_99] : memref<16x32xf32, #tpu.memory_space<vmem>>, vector<2x32xf32>
    tpu.vector_store %arg11[%c14_98, %c0_99], %295 {strides = array<i32>} : memref<16x32xf32, #tpu.memory_space<vmem>>, vector<2x32xf32>,
    %c0_100 = arith.constant 0 : index
    %c0_101 = arith.constant 0 : index
    %297 = vector.load %arg11[%c0_100, %c0_101] : memref<16x32xf32, #tpu.memory_space<vmem>>, vector<16x32xf32>
    %cst_102 = arith.constant 0.000000e+00 : f32
    %298 = vector.broadcast %cst_102 : f32 to vector<16x32xf32>
    %299 = arith.cmpf oge, %297, %298 : vector<16x32xf32>
    %cst_103 = arith.constant 0.00999999977 : f32
    %300 = vector.broadcast %cst_103 : f32 to vector<16x32xf32>
    %301 = arith.mulf %300, %297 : vector<16x32xf32>
    %302 = arith.select %299, %297, %301 : vector<16x32xi1>, vector<16x32xf32>
    %c0_104 = arith.constant 0 : index
    %c0_105 = arith.constant 0 : index
    %303 = vector.load %arg8[%c0_104, %c0_105] : memref<32x128xf32, #tpu.memory_space<vmem>>, vector<32x128xf32>
    %cst_106 = arith.constant dense<0.000000e+00> : vector<16x128xf32>
    %304 = tpu.matmul %302, %303, %cst_106 {dimension_numbers = #tpu.dot_dimension_numbers<[1], [0], [0], [1], [0, 0, 1, 1], [], []>} : vector<16x32xf32>, vector<32x128xf32>, vector<16x128xf32> -> vector<16x128xf32>
    %305 = tpu.iota {dimensions = array<i32: 0>} : vector<16x128xi32>
    %c2_i32 = arith.constant 2 : i32
    %c0_i32 = arith.constant 0 : i32
    %306 = arith.cmpi eq, %c2_i32, %c0_i32 : i32
    %c1_i32 = arith.constant 1 : i32
    %307 = arith.select %306, %c1_i32, %c2_i32 : i32
    %308 = vector.broadcast %307 : i32 to vector<16x128xi32>
    %309 = arith.remsi %305, %308 : vector<16x128xi32>
    %c0_i32_107 = arith.constant 0 : i32
    %310 = vector.broadcast %c0_i32_107 : i32 to vector<16x128xi32>
    %311 = arith.cmpi ne, %309, %310 : vector<16x128xi32>
    %c0_i32_108 = arith.constant 0 : i32
    %312 = vector.broadcast %c0_i32_108 : i32 to vector<16x128xi32>
    %313 = arith.cmpi slt, %309, %312 : vector<16x128xi32>
    %c0_i32_109 = arith.constant 0 : i32
    %314 = arith.cmpi slt, %307, %c0_i32_109 : i32
    %315 = vector.broadcast %314 : i1 to vector<16x128xi1>
    %316 = vector.broadcast %315 : vector<16x128xi1> to vector<16x128xi1>
    %317 = arith.xori %313, %316 : vector<16x128xi1>
    %318 = arith.andi %317, %311 : vector<16x128xi1>
    %319 = vector.broadcast %307 : i32 to vector<16x128xi32>
    %320 = arith.addi %309, %319 : vector<16x128xi32>
    %321 = arith.select %318, %320, %309 : vector<16x128xi1>, vector<16x128xi32>
    %cst_110 = arith.constant 0.000000e+00 : f32
    %322 = vector.broadcast %cst_110 : f32 to vector<16x128xf32>
    %c0_i32_111 = arith.constant 0 : i32
    %323 = vector.broadcast %c0_i32_111 : i32 to vector<16x128xi32>
    %324 = arith.cmpi eq, %321, %323 : vector<16x128xi32>
    %cst_112 = arith.constant 0xFF800000 : f32
    %325 = vector.broadcast %cst_112 : f32 to vector<16x128xf32>
    %326 = arith.select %324, %304, %325 : vector<16x128xi1>, vector<16x128xf32>
    %cst_113 = arith.constant dense<0xFF800000> : vector<128xf32>
    %327 = vector.multi_reduction <maximumf>, %326, %cst_113 [0] : vector<16x128xf32> to vector<128xf32>
    %328 = vector.shape_cast %327 : vector<128xf32> to vector<1x128xf32>
    %329 = vector.broadcast %328 : vector<1x128xf32> to vector<16x128xf32>
    %330 = arith.subf %304, %329 : vector<16x128xf32>
    %331 = math.exp %330 : vector<16x128xf32>
    %cst_114 = arith.constant 0.000000e+00 : f32
    %332 = vector.broadcast %cst_114 : f32 to vector<16x128xf32>
    %333 = arith.select %324, %331, %332 : vector<16x128xi1>, vector<16x128xf32>
    %cst_115 = arith.constant dense<0.000000e+00> : vector<128xf32>
    %334 = vector.multi_reduction <add>, %333, %cst_115 [0] : vector<16x128xf32> to vector<128xf32>
    %335 = vector.shape_cast %334 : vector<128xf32> to vector<1x128xf32>
    %336 = math.log %335 : vector<1x128xf32>
    %337 = vector.broadcast %336 : vector<1x128xf32> to vector<16x128xf32>
    %338 = arith.subf %330, %337 : vector<16x128xf32>
    %339 = arith.select %324, %338, %322 : vector<16x128xi1>, vector<16x128xf32>
    %c1_i32_116 = arith.constant 1 : i32
    %340 = vector.broadcast %c1_i32_116 : i32 to vector<16x128xi32>
    %341 = arith.cmpi eq, %321, %340 : vector<16x128xi32>
    %cst_117 = arith.constant 0xFF800000 : f32
    %342 = vector.broadcast %cst_117 : f32 to vector<16x128xf32>
    %343 = arith.select %341, %304, %342 : vector<16x128xi1>, vector<16x128xf32>
    %cst_118 = arith.constant dense<0xFF800000> : vector<128xf32>
    %344 = vector.multi_reduction <maximumf>, %343, %cst_118 [0] : vector<16x128xf32> to vector<128xf32>
    %345 = vector.shape_cast %344 : vector<128xf32> to vector<1x128xf32>
    %346 = vector.broadcast %345 : vector<1x128xf32> to vector<16x128xf32>
    %347 = arith.subf %304, %346 : vector<16x128xf32>
    %348 = math.exp %347 : vector<16x128xf32>
    %cst_119 = arith.constant 0.000000e+00 : f32
    %349 = vector.broadcast %cst_119 : f32 to vector<16x128xf32>
    %350 = arith.select %341, %348, %349 : vector<16x128xi1>, vector<16x128xf32>
    %cst_120 = arith.constant dense<0.000000e+00> : vector<128xf32>
    %351 = vector.multi_reduction <add>, %350, %cst_120 [0] : vector<16x128xf32> to vector<128xf32>
    %352 = vector.shape_cast %351 : vector<128xf32> to vector<1x128xf32>
    %353 = math.log %352 : vector<1x128xf32>
    %354 = vector.broadcast %353 : vector<1x128xf32> to vector<16x128xf32>
    %355 = arith.subf %347, %354 : vector<16x128xf32>
    %356 = arith.select %341, %355, %339 : vector<16x128xi1>, vector<16x128xf32>
    %c0_121 = arith.constant 0 : index
    %c0_122 = arith.constant 0 : index
    %357 = vector.load %arg9[%c0_121, %c0_122] : memref<16x128xf32, #tpu.memory_space<vmem>>, vector<16x128xf32>
    tpu.vector_store %arg9[%c0_121, %c0_122], %356 {strides = array<i32>} : memref<16x128xf32, #tpu.memory_space<vmem>>, vector<16x128xf32>,
    return
  }
  func.func @transform_0(%arg0: i32) -> (i32, i32) {
    %c0_i32 = arith.constant 0 : i32
    %c0_i32_0 = arith.constant 0 : i32
    %c0_i32_1 = arith.constant 0 : i32
    return %c0_i32, %c0_i32_0 : i32, i32
  }
  func.func @transform_1(%arg0: i32) -> (i32, i32) {
    %c0_i32 = arith.constant 0 : i32
    %c0_i32_0 = arith.constant 0 : i32
    %c0_i32_1 = arith.constant 0 : i32
    return %c0_i32, %c0_i32_0 : i32, i32
  }
  func.func @transform_2(%arg0: i32) -> (i32, i32) {
    %c0_i32 = arith.constant 0 : i32
    %c0_i32_0 = arith.constant 0 : i32
    %c0_i32_1 = arith.constant 0 : i32
    return %c0_i32, %c0_i32_0 : i32, i32
  }
  func.func @transform_3(%arg0: i32) -> (i32, i32) {
    %c0_i32 = arith.constant 0 : i32
    %c0_i32_0 = arith.constant 0 : i32
    %c0_i32_1 = arith.constant 0 : i32
    return %c0_i32, %c0_i32_0 : i32, i32
  }
  func.func @transform_4(%arg0: i32) -> (i32, i32) {
    %c0_i32 = arith.constant 0 : i32
    %c0_i32_0 = arith.constant 0 : i32
    %c0_i32_1 = arith.constant 0 : i32
    return %c0_i32, %c0_i32_0 : i32, i32
  }
  func.func @transform_5(%arg0: i32) -> (i32, i32) {
    %c0_i32 = arith.constant 0 : i32
    %c0_i32_0 = arith.constant 0 : i32
    %c0_i32_1 = arith.constant 0 : i32
    return %c0_i32, %c0_i32_0 : i32, i32
  }
  func.func @transform_6(%arg0: i32) -> (i32, i32) {
    %c0_i32 = arith.constant 0 : i32
    %c0_i32_0 = arith.constant 0 : i32
    %c0_i32_1 = arith.constant 0 : i32
    return %c0_i32, %c0_i32_0 : i32, i32
  }
  func.func @transform_7(%arg0: i32) -> (i32, i32) {
    %c0_i32 = arith.constant 0 : i32
    %c0_i32_0 = arith.constant 0 : i32
    %c0_i32_1 = arith.constant 0 : i32
    return %c0_i32, %c0_i32_0 : i32, i32
  }
  func.func @transform_8(%arg0: i32) -> (i32, i32) {
    %c0_i32 = arith.constant 0 : i32
    %c0_i32_0 = arith.constant 0 : i32
    %c0_i32_1 = arith.constant 0 : i32
    return %c0_i32, %c0_i32_0 : i32, i32
  }
}

</mosaic_0001>

<llo_original>
// kernel: lstmnet_forward.1
$region0: #{lstmnet_forward.1}
  #allocation0 [shape = 'u32[]', space=smem, size = 0x4, offset = 0x4, fixed_abs, tag = 'smem constant byte address 0x4 - core index']
  #allocation1 [shape = 'u32[144,128]{1,0:T(1,128)}', space=vmem, size = 0x12000, scoped, tag = 'internal scratch']
  #allocation2 [shape = 'f32[16,128]{1,0:T(8,128)}', space=vmem, size = 0x2000, scoped, tag = 'scratch operand']
  #allocation3 [shape = 'f32[16,32]{1,0:T(8,128)}', space=vmem, size = 0x2000, scoped, tag = 'scratch operand']
  %s0 = inlined_call_operand.vmem [shape: f32[16,128], index: 0, kind: input, shape index: {}]
  %s1 = inlined_call_operand.hbm [shape: f32[128,128], index: 1, kind: input, shape index: {}]
  %s2 = inlined_call_operand.vmem [shape: f32[32,128], index: 2, kind: input, shape index: {}]
  %s3 = inlined_call_operand.vmem [shape: f32[1,128], index: 3, kind: input, shape index: {}]
  %s4 = inlined_call_operand.hbm [shape: f32[32,128], index: 4, kind: input, shape index: {}]
  %s5 = inlined_call_operand.hbm [shape: f32[32,128], index: 5, kind: input, shape index: {}]
  %s6 = inlined_call_operand.vmem [shape: f32[1,128], index: 6, kind: input, shape index: {}]
  %s7 = inlined_call_operand.vmem [shape: f32[32,128], index: 7, kind: input, shape index: {}]
  %s8 = inlined_call_operand.vmem [shape: f32[16,128], index: 8, kind: output, shape index: {}]
  %s9 = sld [smem:[#allocation0]]
  $region54: #{lstmnet_forward.1} parent=0
    _
  %s11 = ssub.s32 1, %s9
  %s12 = scalar_select 0, %s11, %s9
  $region1: #{lstmnet_forward.1} parent=0
    #allocation4 [shape = 'u8[65536]{0}', space=vmem, size = 0x10000, scoped, tag = 'input window, operand 1, single buffered']
    #allocation5 [shape = 's32[1]{0}', space=sflag, size = 0x4, scoped, tag = 'scoped memory for lstmnet_forward.1']
    #allocation6 [shape = 'u8[16384]{0}', space=vmem, size = 0x4000, scoped, tag = 'input window, operand 4, single buffered']
    #allocation7 [shape = 's32[1]{0}', space=sflag, size = 0x4, scoped, tag = 'scoped memory for lstmnet_forward.1']
    #allocation8 [shape = 'u8[16384]{0}', space=vmem, size = 0x4000, scoped, tag = 'input window, operand 5, single buffered']
    %13 = vsyncpa [#allocation5], 0
    %14 = vsyncpa [#allocation7], 0
    // Predicated region
    $region2: #{lstmnet_forward.1} parent=1 // pred_check
      _
    $region3: #{lstmnet_forward.1} parent=1 // pred_check_branch
      %16 = sbr.rel (0) target = $region5
    $region4: #{lstmnet_forward.1} parent=1 // pred_region
      _
    $region5: #{lstmnet_forward.1} parent=1 // pred_fallthru
      _
    // Predicated region
    $region6: #{lstmnet_forward.1} parent=1 // pred_check
      _
    $region7: #{lstmnet_forward.1} parent=1 // pred_check_branch
      %18 = sbr.rel (0) target = $region9
    $region8: #{lstmnet_forward.1} parent=1 // pred_region
      %s20 = ssub.s32 2048, 2048
      %21 = vsyncadd [#allocation5], %s20
      %s22 = sshll.u32 [#allocation4], 4
      %s23 = int_to_ptr.vmem [resolvable:$true] %s22
      %28 = dma.hbm_to_vmem [thread:$0]  %s1, 2048, %s23, [#allocation5], 128, 128, 8
    $region9: #{lstmnet_forward.1} parent=1 // pred_fallthru
      _
    // Predicated region
    $region10: #{lstmnet_forward.1} parent=1 // pred_check
      _
    $region11: #{lstmnet_forward.1} parent=1 // pred_check_branch
      %30 = sbr.rel (0) target = $region13
    $region12: #{lstmnet_forward.1} parent=1 // pred_region
      _
    $region13: #{lstmnet_forward.1} parent=1 // pred_fallthru
      _
    // Predicated region
    $region14: #{lstmnet_forward.1} parent=1 // pred_check
      _
    $region15: #{lstmnet_forward.1} parent=1 // pred_check_branch
      %32 = sbr.rel (0) target = $region17
    $region16: #{lstmnet_forward.1} parent=1 // pred_region
      _
    $region17: #{lstmnet_forward.1} parent=1 // pred_fallthru
      _
    // Predicated region
    $region18: #{lstmnet_forward.1} parent=1 // pred_check
      _
    $region19: #{lstmnet_forward.1} parent=1 // pred_check_branch
      %34 = sbr.rel (0) target = $region21
    $region20: #{lstmnet_forward.1} parent=1 // pred_region
      %s36 = ssub.s32 512, 512
      %37 = vsyncadd [#allocation7], %s36
      %s38 = sshll.u32 [#allocation6], 4
      %s39 = int_to_ptr.vmem [resolvable:$true] %s38
      %44 = dma.hbm_to_vmem [thread:$0]  %s4, 512, %s39, [#allocation7], 128, 128, 8
    $region21: #{lstmnet_forward.1} parent=1 // pred_fallthru
      _
    // Predicated region
    $region22: #{lstmnet_forward.1} parent=1 // pred_check
      _
    $region23: #{lstmnet_forward.1} parent=1 // pred_check_branch
      %46 = sbr.rel (0) target = $region25
    $region24: #{lstmnet_forward.1} parent=1 // pred_region
      %s48 = ssub.s32 512, 512
      %49 = vsyncadd [#allocation7], %s48
      %s50 = sshll.u32 [#allocation8], 4
      %s51 = int_to_ptr.vmem [resolvable:$true] %s50
      %56 = dma.hbm_to_vmem [thread:$0]  %s5, 512, %s51, [#allocation7], 128, 128, 8
    $region25: #{lstmnet_forward.1} parent=1 // pred_fallthru
      _
    // Predicated region
    $region26: #{lstmnet_forward.1} parent=1 // pred_check
      _
    $region27: #{lstmnet_forward.1} parent=1 // pred_check_branch
      %58 = sbr.rel (0) target = $region29
    $region28: #{lstmnet_forward.1} parent=1 // pred_region
      _
    $region29: #{lstmnet_forward.1} parent=1 // pred_fallthru
      _
    // Predicated region
    $region30: #{lstmnet_forward.1} parent=1 // pred_check
      _
    $region31: #{lstmnet_forward.1} parent=1 // pred_check_branch
      %60 = sbr.rel (0) target = $region33
    $region32: #{lstmnet_forward.1} parent=1 // pred_region
      _
    $region33: #{lstmnet_forward.1} parent=1 // pred_fallthru
      _
    // Predicated region
    $region34: #{lstmnet_forward.1} parent=1 // pred_check
      _
    $region35: #{lstmnet_forward.1} parent=1 // pred_check_branch
      %62 = sbr.rel (0) target = $region37
    $region36: #{lstmnet_forward.1} parent=1 // pred_region
      %63 = dma.done [#allocation5], 2048
    $region37: #{lstmnet_forward.1} parent=1 // pred_fallthru
      _
    // Predicated region
    $region38: #{lstmnet_forward.1} parent=1 // pred_check
      _
    $region39: #{lstmnet_forward.1} parent=1 // pred_check_branch
      %65 = sbr.rel (0) target = $region41
    $region40: #{lstmnet_forward.1} parent=1 // pred_region
      %66 = dma.done [#allocation7], 512
    $region41: #{lstmnet_forward.1} parent=1 // pred_fallthru
      _
    // Predicated region
    $region42: #{lstmnet_forward.1} parent=1 // pred_check
      _
    $region43: #{lstmnet_forward.1} parent=1 // pred_check_branch
      %68 = sbr.rel (0) target = $region45
    $region44: #{lstmnet_forward.1} parent=1 // pred_region
      %69 = dma.done [#allocation7], 512
    $region45: #{lstmnet_forward.1} parent=1 // pred_fallthru
      _
    %vm70 = vcmask 523264
    %v71 = vsel %vm70, 0.5, 1.0
    %vm72 = vcmask 785408
    %v73 = vsel %vm72, %v71, 0.5
    %v74 = vsel %vm70, 0.5, 0.0
    %v75 = vsel %vm72, %v74, 0.5
    %v76 = vld [vmem:[%s0] sm:$0xff]
    %v77 = vld [vmem:[%s0 + $0x8] sm:$0xff]
    %v78 = vld [vmem:[#allocation4] sm:$0xff]
    %v79 = vld [vmem:[#allocation4 + $0x8] sm:$0xff]
    %v80 = vld [vmem:[#allocation4 + $0x10] sm:$0xff]
    %v81 = vld [vmem:[#allocation4 + $0x18] sm:$0xff]
    %v82 = vld [vmem:[#allocation4 + $0x20] sm:$0xff]
    %v83 = vld [vmem:[#allocation4 + $0x28] sm:$0xff]
    %v84 = vld [vmem:[#allocation4 + $0x30] sm:$0xff]
    %v85 = vld [vmem:[#allocation4 + $0x38] sm:$0xff]
    %v86 = vld [vmem:[#allocation4 + $0x40] sm:$0xff]
    %v87 = vld [vmem:[#allocation4 + $0x48] sm:$0xff]
    %v88 = vld [vmem:[#allocation4 + $0x50] sm:$0xff]
    %v89 = vld [vmem:[#allocation4 + $0x58] sm:$0xff]
    %v90 = vld [vmem:[#allocation4 + $0x60] sm:$0xff]
    %v91 = vld [vmem:[#allocation4 + $0x68] sm:$0xff]
    %v92 = vld [vmem:[#allocation4 + $0x70] sm:$0xff]
    %v93 = vld [vmem:[#allocation4 + $0x78] sm:$0xff]
    %v94 = vld [vmem:[%s3] sm:$0x1]
    %v96 = vlaneseq
    %v97 = vshrl.u32 %v96, 7
    %v98 = vsub.s32 0, %v97
    %v99 = vrot.slane %v94, %v98
    %101 = vmatprep.subr.mxu0 0.0
    %102 = vmatpush1.msra.mxu0 %v78
    %103 = vmatprep.subr.mxu0 0.0
    %104 = vmatpush1.msra.mxu0 %v79
    %105 = vmatprep.subr.mxu0 0.0
    %106 = vmatpush1.msra.mxu0 %v80
    %107 = vmatprep.subr.mxu0 0.0
    %108 = vmatpush1.msra.mxu0 %v81
    %109 = vmatprep.subr.mxu0 0.0
    %110 = vmatpush1.msra.mxu0 %v82
    %111 = vmatprep.subr.mxu0 0.0
    %112 = vmatpush1.msra.mxu0 %v83
    %113 = vmatprep.subr.mxu0 0.0
    %114 = vmatpush1.msra.mxu0 %v84
    %115 = vmatprep.subr.mxu0 0.0
    %116 = vmatpush1.msra.mxu0 %v85
    %117 = vmatprep.subr.mxu0 0.0
    %118 = vmatpush1.msra.mxu0 %v86
    %119 = vmatprep.subr.mxu0 0.0
    %120 = vmatpush1.msra.mxu0 %v87
    %121 = vmatprep.subr.mxu0 0.0
    %122 = vmatpush1.msra.mxu0 %v88
    %123 = vmatprep.subr.mxu0 0.0
    %124 = vmatpush1.msra.mxu0 %v89
    %125 = vmatprep.subr.mxu0 0.0
    %126 = vmatpush1.msra.mxu0 %v90
    %127 = vmatprep.subr.mxu0 0.0
    %128 = vmatpush1.msra.mxu0 %v91
    %129 = vmatprep.subr.mxu0 0.0
    %130 = vmatpush1.msra.mxu0 %v92
    %131 = vmatprep.subr.mxu0 0.0
    %132 = vmatpush1.msra.mxu0 %v93
    %133 = vmatprep.subr.mxu0 0.0
    %134 = vmatpush1.msra.mxu0 0.0
    %135 = vmatprep.subr.mxu0 0.0
    %136 = vmatpush1.msra.mxu0 0.0
    %137 = vmatprep.subr.mxu0 0.0
    %138 = vmatpush1.msra.mxu0 0.0
    %139 = vmatprep.subr.mxu0 0.0
    %140 = vmatpush1.msra.mxu0 0.0
    %141 = vmatprep.subr.mxu0 0.0
    %142 = vmatpush1.msra.mxu0 0.0
    %143 = vmatprep.subr.mxu0 0.0
    %144 = vmatpush1.msra.mxu0 0.0
    %145 = vmatprep.subr.mxu0 0.0
    %146 = vmatpush1.msra.mxu0 0.0
    %147 = vmatprep.subr.mxu0 0.0
    %148 = vmatpush1.msra.mxu0 0.0
    %149 = vmatprep.subr.mxu0 0.0
    %150 = vmatpush1.msra.mxu0 0.0
    %151 = vmatprep.subr.mxu0 0.0
    %152 = vmatpush1.msra.mxu0 0.0
    %153 = vmatprep.subr.mxu0 0.0
    %154 = vmatpush1.msra.mxu0 0.0
    %155 = vmatprep.subr.mxu0 0.0
    %156 = vmatpush1.msra.mxu0 0.0
    %157 = vmatprep.subr.mxu0 0.0
    %158 = vmatpush1.msra.mxu0 0.0
    %159 = vmatprep.subr.mxu0 0.0
    %160 = vmatpush1.msra.mxu0 0.0
    %161 = vmatprep.subr.mxu0 0.0
    %162 = vmatpush1.msra.mxu0 0.0
    %163 = vmatprep.subr.mxu0 0.0
    %164 = vmatpush1.msra.mxu0 0.0
    %165 = vmatprep.mubr.f32.mxu0 0.0
    %166 = vmatmul.mubr.f32.gmra.mrb[0].mxu0 %v76
    %v167 = vpop.f32.mrb[0].mxu0
    %v168 = vadd.f32 %v99, %v167
    %v169 = vpop.f32.mrb[0].mxu0
    %170 = vmatprep.mubr.f32.mxu0 0.0
    %171 = vmatmul.mubr.f32.gmra.mrb[0].mxu0 %v77
    %v172 = vpop.f32.mrb[0].mxu0
    %v173 = vadd.f32 %v99, %v172
    %v174 = vpop.f32.mrb[0].mxu0
    %175 = vdwg.mxu0
    %176 = vst [vmem:[#allocation2] sm:$0xff] %v168
    %177 = vst [vmem:[#allocation2 + $0x8] sm:$0xff] %v173
    %v178 = vld [vmem:[%s2] sm:$0xff]
    %v179 = vld [vmem:[%s2 + $0x8] sm:$0xff]
    %v180 = vld [vmem:[%s2 + $0x10] sm:$0xff]
    %v181 = vld [vmem:[%s2 + $0x18] sm:$0xff]
    %v182 = vld [vmem:[#allocation2] sm:$0x3]
    %vm183 = vcmask 261120
    %v185 = vsel %vm183, 0.0, 0
    %187 = vmatprep.subr.mxu0 0.0
    %188 = vmatpush1.msra.mxu0 %v178
    %189 = vmatprep.subr.mxu0 0.0
    %190 = vmatpush1.msra.mxu0 %v179
    %191 = vmatprep.subr.mxu0 0.0
    %192 = vmatpush1.msra.mxu0 %v180
    %193 = vmatprep.subr.mxu0 0.0
    %194 = vmatpush1.msra.mxu0 %v181
    %195 = vmatprep.subr.mxu0 0.0
    %196 = vmatpush1.msra.mxu0 0.0
    %197 = vmatprep.subr.mxu0 0.0
    %198 = vmatpush1.msra.mxu0 0.0
    %199 = vmatprep.subr.mxu0 0.0
    %200 = vmatpush1.msra.mxu0 0.0
    %201 = vmatprep.subr.mxu0 0.0
    %202 = vmatpush1.msra.mxu0 0.0
    %203 = vmatprep.subr.mxu0 0.0
    %204 = vmatpush1.msra.mxu0 0.0
    %205 = vmatprep.subr.mxu0 0.0
    %206 = vmatpush1.msra.mxu0 0.0
    %207 = vmatprep.subr.mxu0 0.0
    %208 = vmatpush1.msra.mxu0 0.0
    %209 = vmatprep.subr.mxu0 0.0
    %210 = vmatpush1.msra.mxu0 0.0
    %211 = vmatprep.subr.mxu0 0.0
    %212 = vmatpush1.msra.mxu0 0.0
    %213 = vmatprep.subr.mxu0 0.0
    %214 = vmatpush1.msra.mxu0 0.0
    %215 = vmatprep.subr.mxu0 0.0
    %216 = vmatpush1.msra.mxu0 0.0
    %217 = vmatprep.subr.mxu0 0.0
    %218 = vmatpush1.msra.mxu0 0.0
    %219 = vmatprep.subr.mxu0 0.0
    %220 = vmatpush1.msra.mxu0 0.0
    %221 = vmatprep.subr.mxu0 0.0
    %222 = vmatpush1.msra.mxu0 0.0
    %223 = vmatprep.subr.mxu0 0.0
    %224 = vmatpush1.msra.mxu0 0.0
    %225 = vmatprep.subr.mxu0 0.0
    %226 = vmatpush1.msra.mxu0 0.0
    %227 = vmatprep.subr.mxu0 0.0
    %228 = vmatpush1.msra.mxu0 0.0
    %229 = vmatprep.subr.mxu0 0.0
    %230 = vmatpush1.msra.mxu0 0.0
    %231 = vmatprep.subr.mxu0 0.0
    %232 = vmatpush1.msra.mxu0 0.0
    %233 = vmatprep.subr.mxu0 0.0
    %234 = vmatpush1.msra.mxu0 0.0
    %235 = vmatprep.subr.mxu0 0.0
    %236 = vmatpush1.msra.mxu0 0.0
    %237 = vmatprep.subr.mxu0 0.0
    %238 = vmatpush1.msra.mxu0 0.0
    %239 = vmatprep.subr.mxu0 0.0
    %240 = vmatpush1.msra.mxu0 0.0
    %241 = vmatprep.subr.mxu0 0.0
    %242 = vmatpush1.msra.mxu0 0.0
    %243 = vmatprep.subr.mxu0 0.0
    %244 = vmatpush1.msra.mxu0 0.0
    %245 = vmatprep.subr.mxu0 0.0
    %246 = vmatpush1.msra.mxu0 0.0
    %247 = vmatprep.subr.mxu0 0.0
    %248 = vmatpush1.msra.mxu0 0.0
    %249 = vmatprep.subr.mxu0 0.0
    %250 = vmatpush1.msra.mxu0 0.0
    %251 = vmatprep.mubr.f32.mxu0 0.0
    %252 = vmatmul.mubr.f32.gmra.mrb[0].mxu0 %v185
    %v253 = vpop.f32.mrb[0].mxu0
    %v254 = vadd.f32 0.0, %v253
    %v255 = vpop.f32.mrb[0].mxu0
    %256 = vdwg.mxu0
    %v257 = vadd.f32 %v182, %v254
    %v258 = vmul.f32 %v73, %v257
    %v259 = vtanh.pop %v258
    %v260 = vmul.f32 %v73, %v259
    %v261 = vadd.f32 %v260, %v75
    %v262 = vmul.f32 %v261, 0.0
    %264 = vrot.lane.b32.xlu0 %v261, 64
    %v265 = vpop.permute.xlu0 %264
    %v267 = vmul.f32 %v261, %v265
    %269 = vrot.lane.b32.xlu0 %v267, 32
    %v270 = vpop.permute.xlu0 %269
    %v272 = vadd.f32 %v262, %v270
    %v273 = vtanh.pop %v272
    %275 = vrot.lane.b32.xlu0 %v273, 64
    %v276 = vpop.permute.xlu0 %275
    %v278 = vmul.f32 %v261, %v276
    %280 = vrot.lane.b32.xlu0 %v278, 32
    %v281 = vpop.permute.xlu0 %280
    %vm283 = vcmask 254976
    %284 = vst.msk [vmem:[#allocation3] sm:$0x3] %vm283, %v281
    %v285 = vld [vmem:[#allocation2 + $0x2] sm:$0x3]
    %v286 = vsel %vm183, %v281, 0
    %288 = vmatprep.subr.mxu0 0.0
    %289 = vmatpush1.msra.mxu0 %v178
    %290 = vmatprep.subr.mxu0 0.0
    %291 = vmatpush1.msra.mxu0 %v179
    %292 = vmatprep.subr.mxu0 0.0
    %293 = vmatpush1.msra.mxu0 %v180
    %294 = vmatprep.subr.mxu0 0.0
    %295 = vmatpush1.msra.mxu0 %v181
    %296 = vmatprep.subr.mxu0 0.0
    %297 = vmatpush1.msra.mxu0 0.0
    %298 = vmatprep.subr.mxu0 0.0
    %299 = vmatpush1.msra.mxu0 0.0
    %300 = vmatprep.subr.mxu0 0.0
    %301 = vmatpush1.msra.mxu0 0.0
    %302 = vmatprep.subr.mxu0 0.0
    %303 = vmatpush1.msra.mxu0 0.0
    %304 = vmatprep.subr.mxu0 0.0
    %305 = vmatpush1.msra.mxu0 0.0
    %306 = vmatprep.subr.mxu0 0.0
    %307 = vmatpush1.msra.mxu0 0.0
    %308 = vmatprep.subr.mxu0 0.0
    %309 = vmatpush1.msra.mxu0 0.0
    %310 = vmatprep.subr.mxu0 0.0
    %311 = vmatpush1.msra.mxu0 0.0
    %312 = vmatprep.subr.mxu0 0.0
    %313 = vmatpush1.msra.mxu0 0.0
    %314 = vmatprep.subr.mxu0 0.0
    %315 = vmatpush1.msra.mxu0 0.0
    %316 = vmatprep.subr.mxu0 0.0
    %317 = vmatpush1.msra.mxu0 0.0
    %318 = vmatprep.subr.mxu0 0.0
    %319 = vmatpush1.msra.mxu0 0.0
    %320 = vmatprep.subr.mxu0 0.0
    %321 = vmatpush1.msra.mxu0 0.0
    %322 = vmatprep.subr.mxu0 0.0
    %323 = vmatpush1.msra.mxu0 0.0
    %324 = vmatprep.subr.mxu0 0.0
    %325 = vmatpush1.msra.mxu0 0.0
    %326 = vmatprep.subr.mxu0 0.0
    %327 = vmatpush1.msra.mxu0 0.0
    %328 = vmatprep.subr.mxu0 0.0
    %329 = vmatpush1.msra.mxu0 0.0
    %330 = vmatprep.subr.mxu0 0.0
    %331 = vmatpush1.msra.mxu0 0.0
    %332 = vmatprep.subr.mxu0 0.0
    %333 = vmatpush1.msra.mxu0 0.0
    %334 = vmatprep.subr.mxu0 0.0
    %335 = vmatpush1.msra.mxu0 0.0
    %336 = vmatprep.subr.mxu0 0.0
    %337 = vmatpush1.msra.mxu0 0.0
    %338 = vmatprep.subr.mxu0 0.0
    %339 = vmatpush1.msra.mxu0 0.0
    %340 = vmatprep.subr.mxu0 0.0
    %341 = vmatpush1.msra.mxu0 0.0
    %342 = vmatprep.subr.mxu0 0.0
    %343 = vmatpush1.msra.mxu0 0.0
    %344 = vmatprep.subr.mxu0 0.0
    %345 = vmatpush1.msra.mxu0 0.0
    %346 = vmatprep.subr.mxu0 0.0
    %347 = vmatpush1.msra.mxu0 0.0
    %348 = vmatprep.subr.mxu0 0.0
    %349 = vmatpush1.msra.mxu0 0.0
    %350 = vmatprep.subr.mxu0 0.0
    %351 = vmatpush1.msra.mxu0 0.0
    %352 = vmatprep.mubr.f32.mxu0 0.0
    %353 = vmatmul.mubr.f32.gmra.mrb[0].mxu0 %v286
    %v354 = vpop.f32.mrb[0].mxu0
    %v355 = vadd.f32 0.0, %v354
    %v356 = vpop.f32.mrb[0].mxu0
    %357 = vdwg.mxu0
    %v358 = vadd.f32 %v285, %v355
    %v359 = vmul.f32 %v73, %v358
    %v360 = vtanh.pop %v359
    %v361 = vmul.f32 %v73, %v360
    %v362 = vadd.f32 %v361, %v75
    %v363 = vmul.f32 %v362, %v272
    %365 = vrot.lane.b32.xlu0 %v362, 64
    %v366 = vpop.permute.xlu0 %365
    %v368 = vmul.f32 %v362, %v366
    %370 = vrot.lane.b32.xlu0 %v368, 32
    %v371 = vpop.permute.xlu0 %370
    %v373 = vadd.f32 %v363, %v371
    %v374 = vtanh.pop %v373
    %376 = vrot.lane.b32.xlu0 %v374, 64
    %v377 = vpop.permute.xlu0 %376
    %v379 = vmul.f32 %v362, %v377
    %381 = vrot.lane.b32.xlu0 %v379, 32
    %v382 = vpop.permute.xlu0 %381
    %384 = vst.msk [vmem:[#allocation3 + $0x2] sm:$0x3] %vm283, %v382
    %v385 = vld [vmem:[#allocation2 + $0x4] sm:$0x3]
    %v386 = vsel %vm183, %v382, 0
    %388 = vmatprep.subr.mxu0 0.0
    %389 = vmatpush1.msra.mxu0 %v178
    %390 = vmatprep.subr.mxu0 0.0
    %391 = vmatpush1.msra.mxu0 %v179
    %392 = vmatprep.subr.mxu0 0.0
    %393 = vmatpush1.msra.mxu0 %v180
    %394 = vmatprep.subr.mxu0 0.0
    %395 = vmatpush1.msra.mxu0 %v181
    %396 = vmatprep.subr.mxu0 0.0
    %397 = vmatpush1.msra.mxu0 0.0
    %398 = vmatprep.subr.mxu0 0.0
    %399 = vmatpush1.msra.mxu0 0.0
    %400 = vmatprep.subr.mxu0 0.0
    %401 = vmatpush1.msra.mxu0 0.0
    %402 = vmatprep.subr.mxu0 0.0
    %403 = vmatpush1.msra.mxu0 0.0
    %404 = vmatprep.subr.mxu0 0.0
    %405 = vmatpush1.msra.mxu0 0.0
    %406 = vmatprep.subr.mxu0 0.0
    %407 = vmatpush1.msra.mxu0 0.0
    %408 = vmatprep.subr.mxu0 0.0
    %409 = vmatpush1.msra.mxu0 0.0
    %410 = vmatprep.subr.mxu0 0.0
    %411 = vmatpush1.msra.mxu0 0.0
    %412 = vmatprep.subr.mxu0 0.0
    %413 = vmatpush1.msra.mxu0 0.0
    %414 = vmatprep.subr.mxu0 0.0
    %415 = vmatpush1.msra.mxu0 0.0
    %416 = vmatprep.subr.mxu0 0.0
    %417 = vmatpush1.msra.mxu0 0.0
    %418 = vmatprep.subr.mxu0 0.0
    %419 = vmatpush1.msra.mxu0 0.0
    %420 = vmatprep.subr.mxu0 0.0
    %421 = vmatpush1.msra.mxu0 0.0
    %422 = vmatprep.subr.mxu0 0.0
    %423 = vmatpush1.msra.mxu0 0.0
    %424 = vmatprep.subr.mxu0 0.0
    %425 = vmatpush1.msra.mxu0 0.0
    %426 = vmatprep.subr.mxu0 0.0
    %427 = vmatpush1.msra.mxu0 0.0
    %428 = vmatprep.subr.mxu0 0.0
    %429 = vmatpush1.msra.mxu0 0.0
    %430 = vmatprep.subr.mxu0 0.0
    %431 = vmatpush1.msra.mxu0 0.0
    %432 = vmatprep.subr.mxu0 0.0
    %433 = vmatpush1.msra.mxu0 0.0
    %434 = vmatprep.subr.mxu0 0.0
    %435 = vmatpush1.msra.mxu0 0.0
    %436 = vmatprep.subr.mxu0 0.0
    %437 = vmatpush1.msra.mxu0 0.0
    %438 = vmatprep.subr.mxu0 0.0
    %439 = vmatpush1.msra.mxu0 0.0
    %440 = vmatprep.subr.mxu0 0.0
    %441 = vmatpush1.msra.mxu0 0.0
    %442 = vmatprep.subr.mxu0 0.0
    %443 = vmatpush1.msra.mxu0 0.0
    %444 = vmatprep.subr.mxu0 0.0
    %445 = vmatpush1.msra.mxu0 0.0
    %446 = vmatprep.subr.mxu0 0.0
    %447 = vmatpush1.msra.mxu0 0.0
    %448 = vmatprep.subr.mxu0 0.0
    %449 = vmatpush1.msra.mxu0 0.0
    %450 = vmatprep.subr.mxu0 0.0
    %451 = vmatpush1.msra.mxu0 0.0
    %452 = vmatprep.mubr.f32.mxu0 0.0
    %453 = vmatmul.mubr.f32.gmra.mrb[0].mxu0 %v386
    %v454 = vpop.f32.mrb[0].mxu0
    %v455 = vadd.f32 0.0, %v454
    %v456 = vpop.f32.mrb[0].mxu0
    %457 = vdwg.mxu0
    %v458 = vadd.f32 %v385, %v455
    %v459 = vmul.f32 %v73, %v458
    %v460 = vtanh.pop %v459
    %v461 = vmul.f32 %v73, %v460
    %v462 = vadd.f32 %v461, %v75
    %v463 = vmul.f32 %v462, %v373
    %465 = vrot.lane.b32.xlu0 %v462, 64
    %v466 = vpop.permute.xlu0 %465
    %v468 = vmul.f32 %v462, %v466
    %470 = vrot.lane.b32.xlu0 %v468, 32
    %v471 = vpop.permute.xlu0 %470
    %v473 = vadd.f32 %v463, %v471
    %v474 = vtanh.pop %v473
    %476 = vrot.lane.b32.xlu0 %v474, 64
    %v477 = vpop.permute.xlu0 %476
    %v479 = vmul.f32 %v462, %v477
    %481 = vrot.lane.b32.xlu0 %v479, 32
    %v482 = vpop.permute.xlu0 %481
    %484 = vst.msk [vmem:[#allocation3 + $0x4] sm:$0x3] %vm283, %v482
    %v485 = vld [vmem:[#allocation2 + $0x6] sm:$0x3]
    %v486 = vsel %vm183, %v482, 0
    %488 = vmatprep.subr.mxu0 0.0
    %489 = vmatpush1.msra.mxu0 %v178
    %490 = vmatprep.subr.mxu0 0.0
    %491 = vmatpush1.msra.mxu0 %v179
    %492 = vmatprep.subr.mxu0 0.0
    %493 = vmatpush1.msra.mxu0 %v180
    %494 = vmatprep.subr.mxu0 0.0
    %495 = vmatpush1.msra.mxu0 %v181
    %496 = vmatprep.subr.mxu0 0.0
    %497 = vmatpush1.msra.mxu0 0.0
    %498 = vmatprep.subr.mxu0 0.0
    %499 = vmatpush1.msra.mxu0 0.0
    %500 = vmatprep.subr.mxu0 0.0
    %501 = vmatpush1.msra.mxu0 0.0
    %502 = vmatprep.subr.mxu0 0.0
    %503 = vmatpush1.msra.mxu0 0.0
    %504 = vmatprep.subr.mxu0 0.0
    %505 = vmatpush1.msra.mxu0 0.0
    %506 = vmatprep.subr.mxu0 0.0
    %507 = vmatpush1.msra.mxu0 0.0
    %508 = vmatprep.subr.mxu0 0.0
    %509 = vmatpush1.msra.mxu0 0.0
    %510 = vmatprep.subr.mxu0 0.0
    %511 = vmatpush1.msra.mxu0 0.0
    %512 = vmatprep.subr.mxu0 0.0
    %513 = vmatpush1.msra.mxu0 0.0
    %514 = vmatprep.subr.mxu0 0.0
    %515 = vmatpush1.msra.mxu0 0.0
    %516 = vmatprep.subr.mxu0 0.0
    %517 = vmatpush1.msra.mxu0 0.0
    %518 = vmatprep.subr.mxu0 0.0
    %519 = vmatpush1.msra.mxu0 0.0
    %520 = vmatprep.subr.mxu0 0.0
    %521 = vmatpush1.msra.mxu0 0.0
    %522 = vmatprep.subr.mxu0 0.0
    %523 = vmatpush1.msra.mxu0 0.0
    %524 = vmatprep.subr.mxu0 0.0
    %525 = vmatpush1.msra.mxu0 0.0
    %526 = vmatprep.subr.mxu0 0.0
    %527 = vmatpush1.msra.mxu0 0.0
    %528 = vmatprep.subr.mxu0 0.0
    %529 = vmatpush1.msra.mxu0 0.0
    %530 = vmatprep.subr.mxu0 0.0
    %531 = vmatpush1.msra.mxu0 0.0
    %532 = vmatprep.subr.mxu0 0.0
    %533 = vmatpush1.msra.mxu0 0.0
    %534 = vmatprep.subr.mxu0 0.0
    %535 = vmatpush1.msra.mxu0 0.0
    %536 = vmatprep.subr.mxu0 0.0
    %537 = vmatpush1.msra.mxu0 0.0
    %538 = vmatprep.subr.mxu0 0.0
    %539 = vmatpush1.msra.mxu0 0.0
    %540 = vmatprep.subr.mxu0 0.0
    %541 = vmatpush1.msra.mxu0 0.0
    %542 = vmatprep.subr.mxu0 0.0
    %543 = vmatpush1.msra.mxu0 0.0
    %544 = vmatprep.subr.mxu0 0.0
    %545 = vmatpush1.msra.mxu0 0.0
    %546 = vmatprep.subr.mxu0 0.0
    %547 = vmatpush1.msra.mxu0 0.0
    %548 = vmatprep.subr.mxu0 0.0
    %549 = vmatpush1.msra.mxu0 0.0
    %550 = vmatprep.subr.mxu0 0.0
    %551 = vmatpush1.msra.mxu0 0.0
    %552 = vmatprep.mubr.f32.mxu0 0.0
    %553 = vmatmul.mubr.f32.gmra.mrb[0].mxu0 %v486
    %v554 = vpop.f32.mrb[0].mxu0
    %v555 = vadd.f32 0.0, %v554
    %v556 = vpop.f32.mrb[0].mxu0
    %557 = vdwg.mxu0
    %v558 = vadd.f32 %v485, %v555
    %v559 = vmul.f32 %v73, %v558
    %v560 = vtanh.pop %v559
    %v561 = vmul.f32 %v73, %v560
    %v562 = vadd.f32 %v561, %v75
    %v563 = vmul.f32 %v562, %v473
    %565 = vrot.lane.b32.xlu0 %v562, 64
    %v566 = vpop.permute.xlu0 %565
    %v568 = vmul.f32 %v562, %v566
    %570 = vrot.lane.b32.xlu0 %v568, 32
    %v571 = vpop.permute.xlu0 %570
    %v573 = vadd.f32 %v563, %v571
    %v574 = vtanh.pop %v573
    %576 = vrot.lane.b32.xlu0 %v574, 64
    %v577 = vpop.permute.xlu0 %576
    %v579 = vmul.f32 %v562, %v577
    %581 = vrot.lane.b32.xlu0 %v579, 32
    %v582 = vpop.permute.xlu0 %581
    %584 = vst.msk [vmem:[#allocation3 + $0x6] sm:$0x3] %vm283, %v582
    %v585 = vld [vmem:[#allocation2 + $0x8] sm:$0x3]
    %v586 = vsel %vm183, %v582, 0
    %588 = vmatprep.subr.mxu0 0.0
    %589 = vmatpush1.msra.mxu0 %v178
    %590 = vmatprep.subr.mxu0 0.0
    %591 = vmatpush1.msra.mxu0 %v179
    %592 = vmatprep.subr.mxu0 0.0
    %593 = vmatpush1.msra.mxu0 %v180
    %594 = vmatprep.subr.mxu0 0.0
    %595 = vmatpush1.msra.mxu0 %v181
    %596 = vmatprep.subr.mxu0 0.0
    %597 = vmatpush1.msra.mxu0 0.0
    %598 = vmatprep.subr.mxu0 0.0
    %599 = vmatpush1.msra.mxu0 0.0
    %600 = vmatprep.subr.mxu0 0.0
    %601 = vmatpush1.msra.mxu0 0.0
    %602 = vmatprep.subr.mxu0 0.0
    %603 = vmatpush1.msra.mxu0 0.0
    %604 = vmatprep.subr.mxu0 0.0
    %605 = vmatpush1.msra.mxu0 0.0
    %606 = vmatprep.subr.mxu0 0.0
    %607 = vmatpush1.msra.mxu0 0.0
    %608 = vmatprep.subr.mxu0 0.0
    %609 = vmatpush1.msra.mxu0 0.0
    %610 = vmatprep.subr.mxu0 0.0
    %611 = vmatpush1.msra.mxu0 0.0
    %612 = vmatprep.subr.mxu0 0.0
    %613 = vmatpush1.msra.mxu0 0.0
    %614 = vmatprep.subr.mxu0 0.0
    %615 = vmatpush1.msra.mxu0 0.0
    %616 = vmatprep.subr.mxu0 0.0
    %617 = vmatpush1.msra.mxu0 0.0
    %618 = vmatprep.subr.mxu0 0.0
    %619 = vmatpush1.msra.mxu0 0.0
    %620 = vmatprep.subr.mxu0 0.0
    %621 = vmatpush1.msra.mxu0 0.0
    %622 = vmatprep.subr.mxu0 0.0
    %623 = vmatpush1.msra.mxu0 0.0
    %624 = vmatprep.subr.mxu0 0.0
    %625 = vmatpush1.msra.mxu0 0.0
    %626 = vmatprep.subr.mxu0 0.0
    %627 = vmatpush1.msra.mxu0 0.0
    %628 = vmatprep.subr.mxu0 0.0
    %629 = vmatpush1.msra.mxu0 0.0
    %630 = vmatprep.subr.mxu0 0.0
    %631 = vmatpush1.msra.mxu0 0.0
    %632 = vmatprep.subr.mxu0 0.0
    %633 = vmatpush1.msra.mxu0 0.0
    %634 = vmatprep.subr.mxu0 0.0
    %635 = vmatpush1.msra.mxu0 0.0
    %636 = vmatprep.subr.mxu0 0.0
    %637 = vmatpush1.msra.mxu0 0.0
    %638 = vmatprep.subr.mxu0 0.0
    %639 = vmatpush1.msra.mxu0 0.0
    %640 = vmatprep.subr.mxu0 0.0
    %641 = vmatpush1.msra.mxu0 0.0
    %642 = vmatprep.subr.mxu0 0.0
    %643 = vmatpush1.msra.mxu0 0.0
    %644 = vmatprep.subr.mxu0 0.0
    %645 = vmatpush1.msra.mxu0 0.0
    %646 = vmatprep.subr.mxu0 0.0
    %647 = vmatpush1.msra.mxu0 0.0
    %648 = vmatprep.subr.mxu0 0.0
    %649 = vmatpush1.msra.mxu0 0.0
    %650 = vmatprep.subr.mxu0 0.0
    %651 = vmatpush1.msra.mxu0 0.0
    %652 = vmatprep.mubr.f32.mxu0 0.0
    %653 = vmatmul.mubr.f32.gmra.mrb[0].mxu0 %v586
    %v654 = vpop.f32.mrb[0].mxu0
    %v655 = vadd.f32 0.0, %v654
    %v656 = vpop.f32.mrb[0].mxu0
    %657 = vdwg.mxu0
    %v658 = vadd.f32 %v585, %v655
    %v659 = vmul.f32 %v73, %v658
    %v660 = vtanh.pop %v659
    %v661 = vmul.f32 %v73, %v660
    %v662 = vadd.f32 %v661, %v75
    %v663 = vmul.f32 %v662, %v573
    %665 = vrot.lane.b32.xlu0 %v662, 64
    %v666 = vpop.permute.xlu0 %665
    %v668 = vmul.f32 %v662, %v666
    %670 = vrot.lane.b32.xlu0 %v668, 32
    %v671 = vpop.permute.xlu0 %670
    %v673 = vadd.f32 %v663, %v671
    %v674 = vtanh.pop %v673
    %676 = vrot.lane.b32.xlu0 %v674, 64
    %v677 = vpop.permute.xlu0 %676
    %v679 = vmul.f32 %v662, %v677
    %681 = vrot.lane.b32.xlu0 %v679, 32
    %v682 = vpop.permute.xlu0 %681
    %684 = vst.msk [vmem:[#allocation3 + $0x8] sm:$0x3] %vm283, %v682
    %v685 = vld [vmem:[#allocation2 + $0xa] sm:$0x3]
    %v686 = vsel %vm183, %v682, 0
    %688 = vmatprep.subr.mxu0 0.0
    %689 = vmatpush1.msra.mxu0 %v178
    %690 = vmatprep.subr.mxu0 0.0
    %691 = vmatpush1.msra.mxu0 %v179
    %692 = vmatprep.subr.mxu0 0.0
    %693 = vmatpush1.msra.mxu0 %v180
    %694 = vmatprep.subr.mxu0 0.0
    %695 = vmatpush1.msra.mxu0 %v181
    %696 = vmatprep.subr.mxu0 0.0
    %697 = vmatpush1.msra.mxu0 0.0
    %698 = vmatprep.subr.mxu0 0.0
    %699 = vmatpush1.msra.mxu0 0.0
    %700 = vmatprep.subr.mxu0 0.0
    %701 = vmatpush1.msra.mxu0 0.0
    %702 = vmatprep.subr.mxu0 0.0
    %703 = vmatpush1.msra.mxu0 0.0
    %704 = vmatprep.subr.mxu0 0.0
    %705 = vmatpush1.msra.mxu0 0.0
    %706 = vmatprep.subr.mxu0 0.0
    %707 = vmatpush1.msra.mxu0 0.0
    %708 = vmatprep.subr.mxu0 0.0
    %709 = vmatpush1.msra.mxu0 0.0
    %710 = vmatprep.subr.mxu0 0.0
    %711 = vmatpush1.msra.mxu0 0.0
    %712 = vmatprep.subr.mxu0 0.0
    %713 = vmatpush1.msra.mxu0 0.0
    %714 = vmatprep.subr.mxu0 0.0
    %715 = vmatpush1.msra.mxu0 0.0
    %716 = vmatprep.subr.mxu0 0.0
    %717 = vmatpush1.msra.mxu0 0.0
    %718 = vmatprep.subr.mxu0 0.0
    %719 = vmatpush1.msra.mxu0 0.0
    %720 = vmatprep.subr.mxu0 0.0
    %721 = vmatpush1.msra.mxu0 0.0
    %722 = vmatprep.subr.mxu0 0.0
    %723 = vmatpush1.msra.mxu0 0.0
    %724 = vmatprep.subr.mxu0 0.0
    %725 = vmatpush1.msra.mxu0 0.0
    %726 = vmatprep.subr.mxu0 0.0
    %727 = vmatpush1.msra.mxu0 0.0
    %728 = vmatprep.subr.mxu0 0.0
    %729 = vmatpush1.msra.mxu0 0.0
    %730 = vmatprep.subr.mxu0 0.0
    %731 = vmatpush1.msra.mxu0 0.0
    %732 = vmatprep.subr.mxu0 0.0
    %733 = vmatpush1.msra.mxu0 0.0
    %734 = vmatprep.subr.mxu0 0.0
    %735 = vmatpush1.msra.mxu0 0.0
    %736 = vmatprep.subr.mxu0 0.0
    %737 = vmatpush1.msra.mxu0 0.0
    %738 = vmatprep.subr.mxu0 0.0
    %739 = vmatpush1.msra.mxu0 0.0
    %740 = vmatprep.subr.mxu0 0.0
    %741 = vmatpush1.msra.mxu0 0.0
    %742 = vmatprep.subr.mxu0 0.0
    %743 = vmatpush1.msra.mxu0 0.0
    %744 = vmatprep.subr.mxu0 0.0
    %745 = vmatpush1.msra.mxu0 0.0
    %746 = vmatprep.subr.mxu0 0.0
    %747 = vmatpush1.msra.mxu0 0.0
    %748 = vmatprep.subr.mxu0 0.0
    %749 = vmatpush1.msra.mxu0 0.0
    %750 = vmatprep.subr.mxu0 0.0
    %751 = vmatpush1.msra.mxu0 0.0
    %752 = vmatprep.mubr.f32.mxu0 0.0
    %753 = vmatmul.mubr.f32.gmra.mrb[0].mxu0 %v686
    %v754 = vpop.f32.mrb[0].mxu0
    %v755 = vadd.f32 0.0, %v754
    %v756 = vpop.f32.mrb[0].mxu0
    %757 = vdwg.mxu0
    %v758 = vadd.f32 %v685, %v755
    %v759 = vmul.f32 %v73, %v758
    %v760 = vtanh.pop %v759
    %v761 = vmul.f32 %v73, %v760
    %v762 = vadd.f32 %v761, %v75
    %v763 = vmul.f32 %v762, %v673
    %765 = vrot.lane.b32.xlu0 %v762, 64
    %v766 = vpop.permute.xlu0 %765
    %v768 = vmul.f32 %v762, %v766
    %770 = vrot.lane.b32.xlu0 %v768, 32
    %v771 = vpop.permute.xlu0 %770
    %v773 = vadd.f32 %v763, %v771
    %v774 = vtanh.pop %v773
    %776 = vrot.lane.b32.xlu0 %v774, 64
    %v777 = vpop.permute.xlu0 %776
    %v779 = vmul.f32 %v762, %v777
    %781 = vrot.lane.b32.xlu0 %v779, 32
    %v782 = vpop.permute.xlu0 %781
    %784 = vst.msk [vmem:[#allocation3 + $0xa] sm:$0x3] %vm283, %v782
    %v785 = vld [vmem:[#allocation2 + $0xc] sm:$0x3]
    %v786 = vsel %vm183, %v782, 0
    %788 = vmatprep.subr.mxu0 0.0
    %789 = vmatpush1.msra.mxu0 %v178
    %790 = vmatprep.subr.mxu0 0.0
    %791 = vmatpush1.msra.mxu0 %v179
    %792 = vmatprep.subr.mxu0 0.0
    %793 = vmatpush1.msra.mxu0 %v180
    %794 = vmatprep.subr.mxu0 0.0
    %795 = vmatpush1.msra.mxu0 %v181
    %796 = vmatprep.subr.mxu0 0.0
    %797 = vmatpush1.msra.mxu0 0.0
    %798 = vmatprep.subr.mxu0 0.0
    %799 = vmatpush1.msra.mxu0 0.0
    %800 = vmatprep.subr.mxu0 0.0
    %801 = vmatpush1.msra.mxu0 0.0
    %802 = vmatprep.subr.mxu0 0.0
    %803 = vmatpush1.msra.mxu0 0.0
    %804 = vmatprep.subr.mxu0 0.0
    %805 = vmatpush1.msra.mxu0 0.0
    %806 = vmatprep.subr.mxu0 0.0
    %807 = vmatpush1.msra.mxu0 0.0
    %808 = vmatprep.subr.mxu0 0.0
    %809 = vmatpush1.msra.mxu0 0.0
    %810 = vmatprep.subr.mxu0 0.0
    %811 = vmatpush1.msra.mxu0 0.0
    %812 = vmatprep.subr.mxu0 0.0
    %813 = vmatpush1.msra.mxu0 0.0
    %814 = vmatprep.subr.mxu0 0.0
    %815 = vmatpush1.msra.mxu0 0.0
    %816 = vmatprep.subr.mxu0 0.0
    %817 = vmatpush1.msra.mxu0 0.0
    %818 = vmatprep.subr.mxu0 0.0
    %819 = vmatpush1.msra.mxu0 0.0
    %820 = vmatprep.subr.mxu0 0.0
    %821 = vmatpush1.msra.mxu0 0.0
    %822 = vmatprep.subr.mxu0 0.0
    %823 = vmatpush1.msra.mxu0 0.0
    %824 = vmatprep.subr.mxu0 0.0
    %825 = vmatpush1.msra.mxu0 0.0
    %826 = vmatprep.subr.mxu0 0.0
    %827 = vmatpush1.msra.mxu0 0.0
    %828 = vmatprep.subr.mxu0 0.0
    %829 = vmatpush1.msra.mxu0 0.0
    %830 = vmatprep.subr.mxu0 0.0
    %831 = vmatpush1.msra.mxu0 0.0
    %832 = vmatprep.subr.mxu0 0.0
    %833 = vmatpush1.msra.mxu0 0.0
    %834 = vmatprep.subr.mxu0 0.0
    %835 = vmatpush1.msra.mxu0 0.0
    %836 = vmatprep.subr.mxu0 0.0
    %837 = vmatpush1.msra.mxu0 0.0
    %838 = vmatprep.subr.mxu0 0.0
    %839 = vmatpush1.msra.mxu0 0.0
    %840 = vmatprep.subr.mxu0 0.0
    %841 = vmatpush1.msra.mxu0 0.0
    %842 = vmatprep.subr.mxu0 0.0
    %843 = vmatpush1.msra.mxu0 0.0
    %844 = vmatprep.subr.mxu0 0.0
    %845 = vmatpush1.msra.mxu0 0.0
    %846 = vmatprep.subr.mxu0 0.0
    %847 = vmatpush1.msra.mxu0 0.0
    %848 = vmatprep.subr.mxu0 0.0
    %849 = vmatpush1.msra.mxu0 0.0
    %850 = vmatprep.subr.mxu0 0.0
    %851 = vmatpush1.msra.mxu0 0.0
    %852 = vmatprep.mubr.f32.mxu0 0.0
    %853 = vmatmul.mubr.f32.gmra.mrb[0].mxu0 %v786
    %v854 = vpop.f32.mrb[0].mxu0
    %v855 = vadd.f32 0.0, %v854
    %v856 = vpop.f32.mrb[0].mxu0
    %857 = vdwg.mxu0
    %v858 = vadd.f32 %v785, %v855
    %v859 = vmul.f32 %v73, %v858
    %v860 = vtanh.pop %v859
    %v861 = vmul.f32 %v73, %v860
    %v862 = vadd.f32 %v861, %v75
    %v863 = vmul.f32 %v862, %v773
    %865 = vrot.lane.b32.xlu0 %v862, 64
    %v866 = vpop.permute.xlu0 %865
    %v868 = vmul.f32 %v862, %v866
    %870 = vrot.lane.b32.xlu0 %v868, 32
    %v871 = vpop.permute.xlu0 %870
    %v873 = vadd.f32 %v863, %v871
    %v874 = vtanh.pop %v873
    %876 = vrot.lane.b32.xlu0 %v874, 64
    %v877 = vpop.permute.xlu0 %876
    %v879 = vmul.f32 %v862, %v877
    %881 = vrot.lane.b32.xlu0 %v879, 32
    %v882 = vpop.permute.xlu0 %881
    %884 = vst.msk [vmem:[#allocation3 + $0xc] sm:$0x3] %vm283, %v882
    %v885 = vld [vmem:[#allocation2 + $0xe] sm:$0x3]
    %v886 = vsel %vm183, %v882, 0
    %888 = vmatprep.subr.mxu0 0.0
    %889 = vmatpush1.msra.mxu0 %v178
    %890 = vmatprep.subr.mxu0 0.0
    %891 = vmatpush1.msra.mxu0 %v179
    %892 = vmatprep.subr.mxu0 0.0
    %893 = vmatpush1.msra.mxu0 %v180
    %894 = vmatprep.subr.mxu0 0.0
    %895 = vmatpush1.msra.mxu0 %v181
    %896 = vmatprep.subr.mxu0 0.0
    %897 = vmatpush1.msra.mxu0 0.0
    %898 = vmatprep.subr.mxu0 0.0
    %899 = vmatpush1.msra.mxu0 0.0
    %900 = vmatprep.subr.mxu0 0.0
    %901 = vmatpush1.msra.mxu0 0.0
    %902 = vmatprep.subr.mxu0 0.0
    %903 = vmatpush1.msra.mxu0 0.0
    %904 = vmatprep.subr.mxu0 0.0
    %905 = vmatpush1.msra.mxu0 0.0
    %906 = vmatprep.subr.mxu0 0.0
    %907 = vmatpush1.msra.mxu0 0.0
    %908 = vmatprep.subr.mxu0 0.0
    %909 = vmatpush1.msra.mxu0 0.0
    %910 = vmatprep.subr.mxu0 0.0
    %911 = vmatpush1.msra.mxu0 0.0
    %912 = vmatprep.subr.mxu0 0.0
    %913 = vmatpush1.msra.mxu0 0.0
    %914 = vmatprep.subr.mxu0 0.0
    %915 = vmatpush1.msra.mxu0 0.0
    %916 = vmatprep.subr.mxu0 0.0
    %917 = vmatpush1.msra.mxu0 0.0
    %918 = vmatprep.subr.mxu0 0.0
    %919 = vmatpush1.msra.mxu0 0.0
    %920 = vmatprep.subr.mxu0 0.0
    %921 = vmatpush1.msra.mxu0 0.0
    %922 = vmatprep.subr.mxu0 0.0
    %923 = vmatpush1.msra.mxu0 0.0
    %924 = vmatprep.subr.mxu0 0.0
    %925 = vmatpush1.msra.mxu0 0.0
    %926 = vmatprep.subr.mxu0 0.0
    %927 = vmatpush1.msra.mxu0 0.0
    %928 = vmatprep.subr.mxu0 0.0
    %929 = vmatpush1.msra.mxu0 0.0
    %930 = vmatprep.subr.mxu0 0.0
    %931 = vmatpush1.msra.mxu0 0.0
    %932 = vmatprep.subr.mxu0 0.0
    %933 = vmatpush1.msra.mxu0 0.0
    %934 = vmatprep.subr.mxu0 0.0
    %935 = vmatpush1.msra.mxu0 0.0
    %936 = vmatprep.subr.mxu0 0.0
    %937 = vmatpush1.msra.mxu0 0.0
    %938 = vmatprep.subr.mxu0 0.0
    %939 = vmatpush1.msra.mxu0 0.0
    %940 = vmatprep.subr.mxu0 0.0
    %941 = vmatpush1.msra.mxu0 0.0
    %942 = vmatprep.subr.mxu0 0.0
    %943 = vmatpush1.msra.mxu0 0.0
    %944 = vmatprep.subr.mxu0 0.0
    %945 = vmatpush1.msra.mxu0 0.0
    %946 = vmatprep.subr.mxu0 0.0
    %947 = vmatpush1.msra.mxu0 0.0
    %948 = vmatprep.subr.mxu0 0.0
    %949 = vmatpush1.msra.mxu0 0.0
    %950 = vmatprep.subr.mxu0 0.0
    %951 = vmatpush1.msra.mxu0 0.0
    %952 = vmatprep.mubr.f32.mxu0 0.0
    %953 = vmatmul.mubr.f32.gmra.mrb[0].mxu0 %v886
    %v954 = vpop.f32.mrb[0].mxu0
    %v955 = vadd.f32 0.0, %v954
    %v956 = vpop.f32.mrb[0].mxu0
    %957 = vdwg.mxu0
    %v958 = vadd.f32 %v885, %v955
    %v959 = vmul.f32 %v73, %v958
    %v960 = vtanh.pop %v959
    %v961 = vmul.f32 %v73, %v960
    %v962 = vadd.f32 %v961, %v75
    %v963 = vmul.f32 %v962, %v873
    %965 = vrot.lane.b32.xlu0 %v962, 64
    %v966 = vpop.permute.xlu0 %965
    %v968 = vmul.f32 %v962, %v966
    %970 = vrot.lane.b32.xlu0 %v968, 32
    %v971 = vpop.permute.xlu0 %970
    %v973 = vadd.f32 %v963, %v971
    %v974 = vtanh.pop %v973
    %976 = vrot.lane.b32.xlu0 %v974, 64
    %v977 = vpop.permute.xlu0 %976
    %v979 = vmul.f32 %v962, %v977
    %981 = vrot.lane.b32.xlu0 %v979, 32
    %v982 = vpop.permute.xlu0 %981
    %984 = vst.msk [vmem:[#allocation3 + $0xe] sm:$0x3] %vm283, %v982
    %v985 = vld [vmem:[#allocation3] sm:$0xff]
    %v986 = vld [vmem:[#allocation3 + $0x8] sm:$0xff]
    %v987 = vld [vmem:[#allocation6] sm:$0xff]
    %v988 = vld [vmem:[#allocation6 + $0x8] sm:$0xff]
    %v989 = vld [vmem:[#allocation6 + $0x10] sm:$0xff]
    %v990 = vld [vmem:[#allocation6 + $0x18] sm:$0xff]
    %v991 = vld [vmem:[%s6] sm:$0x1]
    %v993 = vlaneseq
    %v994 = vshrl.u32 %v993, 7
    %v995 = vsub.s32 0, %v994
    %v996 = vrot.slane %v991, %v995
    %v999 = vsel %vm183, %v985, 0
    %v1002 = vsel %vm183, %v986, 0
    %1004 = vmatprep.subr.mxu0 0.0
    %1005 = vmatpush1.msra.mxu0 %v987
    %1006 = vmatprep.subr.mxu0 0.0
    %1007 = vmatpush1.msra.mxu0 %v988
    %1008 = vmatprep.subr.mxu0 0.0
    %1009 = vmatpush1.msra.mxu0 %v989
    %1010 = vmatprep.subr.mxu0 0.0
    %1011 = vmatpush1.msra.mxu0 %v990
    %1012 = vmatprep.subr.mxu0 0.0
    %1013 = vmatpush1.msra.mxu0 0.0
    %1014 = vmatprep.subr.mxu0 0.0
    %1015 = vmatpush1.msra.mxu0 0.0
    %1016 = vmatprep.subr.mxu0 0.0
    %1017 = vmatpush1.msra.mxu0 0.0
    %1018 = vmatprep.subr.mxu0 0.0
    %1019 = vmatpush1.msra.mxu0 0.0
    %1020 = vmatprep.subr.mxu0 0.0
    %1021 = vmatpush1.msra.mxu0 0.0
    %1022 = vmatprep.subr.mxu0 0.0
    %1023 = vmatpush1.msra.mxu0 0.0
    %1024 = vmatprep.subr.mxu0 0.0
    %1025 = vmatpush1.msra.mxu0 0.0
    %1026 = vmatprep.subr.mxu0 0.0
    %1027 = vmatpush1.msra.mxu0 0.0
    %1028 = vmatprep.subr.mxu0 0.0
    %1029 = vmatpush1.msra.mxu0 0.0
    %1030 = vmatprep.subr.mxu0 0.0
    %1031 = vmatpush1.msra.mxu0 0.0
    %1032 = vmatprep.subr.mxu0 0.0
    %1033 = vmatpush1.msra.mxu0 0.0
    %1034 = vmatprep.subr.mxu0 0.0
    %1035 = vmatpush1.msra.mxu0 0.0
    %1036 = vmatprep.subr.mxu0 0.0
    %1037 = vmatpush1.msra.mxu0 0.0
    %1038 = vmatprep.subr.mxu0 0.0
    %1039 = vmatpush1.msra.mxu0 0.0
    %1040 = vmatprep.subr.mxu0 0.0
    %1041 = vmatpush1.msra.mxu0 0.0
    %1042 = vmatprep.subr.mxu0 0.0
    %1043 = vmatpush1.msra.mxu0 0.0
    %1044 = vmatprep.subr.mxu0 0.0
    %1045 = vmatpush1.msra.mxu0 0.0
    %1046 = vmatprep.subr.mxu0 0.0
    %1047 = vmatpush1.msra.mxu0 0.0
    %1048 = vmatprep.subr.mxu0 0.0
    %1049 = vmatpush1.msra.mxu0 0.0
    %1050 = vmatprep.subr.mxu0 0.0
    %1051 = vmatpush1.msra.mxu0 0.0
    %1052 = vmatprep.subr.mxu0 0.0
    %1053 = vmatpush1.msra.mxu0 0.0
    %1054 = vmatprep.subr.mxu0 0.0
    %1055 = vmatpush1.msra.mxu0 0.0
    %1056 = vmatprep.subr.mxu0 0.0
    %1057 = vmatpush1.msra.mxu0 0.0
    %1058 = vmatprep.subr.mxu0 0.0
    %1059 = vmatpush1.msra.mxu0 0.0
    %1060 = vmatprep.subr.mxu0 0.0
    %1061 = vmatpush1.msra.mxu0 0.0
    %1062 = vmatprep.subr.mxu0 0.0
    %1063 = vmatpush1.msra.mxu0 0.0
    %1064 = vmatprep.subr.mxu0 0.0
    %1065 = vmatpush1.msra.mxu0 0.0
    %1066 = vmatprep.subr.mxu0 0.0
    %1067 = vmatpush1.msra.mxu0 0.0
    %1068 = vmatprep.mubr.f32.mxu0 0.0
    %1069 = vmatmul.mubr.f32.gmra.mrb[0].mxu0 %v999
    %v1070 = vpop.f32.mrb[0].mxu0
    %v1071 = vadd.f32 %v996, %v1070
    %v1072 = vpop.f32.mrb[0].mxu0
    %1073 = vmatprep.mubr.f32.mxu0 0.0
    %1074 = vmatmul.mubr.f32.gmra.mrb[0].mxu0 %v1002
    %v1075 = vpop.f32.mrb[0].mxu0
    %v1076 = vadd.f32 %v996, %v1075
    %v1077 = vpop.f32.mrb[0].mxu0
    %1078 = vdwg.mxu0
    %1079 = vst [vmem:[#allocation2] sm:$0xff] %v1071
    %1080 = vst [vmem:[#allocation2 + $0x8] sm:$0xff] %v1076
    %v1081 = vld [vmem:[#allocation8] sm:$0xff]
    %v1082 = vld [vmem:[#allocation8 + $0x8] sm:$0xff]
    %v1083 = vld [vmem:[#allocation8 + $0x10] sm:$0xff]
    %v1084 = vld [vmem:[#allocation8 + $0x18] sm:$0xff]
    %v1085 = vld [vmem:[#allocation2] sm:$0x3]
    %1086 = vmatprep.subr.mxu0 0.0
    %1087 = vmatpush1.msra.mxu0 %v1081
    %1088 = vmatprep.subr.mxu0 0.0
    %1089 = vmatpush1.msra.mxu0 %v1082
    %1090 = vmatprep.subr.mxu0 0.0
    %1091 = vmatpush1.msra.mxu0 %v1083
    %1092 = vmatprep.subr.mxu0 0.0
    %1093 = vmatpush1.msra.mxu0 %v1084
    %1094 = vmatprep.subr.mxu0 0.0
    %1095 = vmatpush1.msra.mxu0 0.0
    %1096 = vmatprep.subr.mxu0 0.0
    %1097 = vmatpush1.msra.mxu0 0.0
    %1098 = vmatprep.subr.mxu0 0.0
    %1099 = vmatpush1.msra.mxu0 0.0
    %1100 = vmatprep.subr.mxu0 0.0
    %1101 = vmatpush1.msra.mxu0 0.0
    %1102 = vmatprep.subr.mxu0 0.0
    %1103 = vmatpush1.msra.mxu0 0.0
    %1104 = vmatprep.subr.mxu0 0.0
    %1105 = vmatpush1.msra.mxu0 0.0
    %1106 = vmatprep.subr.mxu0 0.0
    %1107 = vmatpush1.msra.mxu0 0.0
    %1108 = vmatprep.subr.mxu0 0.0
    %1109 = vmatpush1.msra.mxu0 0.0
    %1110 = vmatprep.subr.mxu0 0.0
    %1111 = vmatpush1.msra.mxu0 0.0
    %1112 = vmatprep.subr.mxu0 0.0
    %1113 = vmatpush1.msra.mxu0 0.0
    %1114 = vmatprep.subr.mxu0 0.0
    %1115 = vmatpush1.msra.mxu0 0.0
    %1116 = vmatprep.subr.mxu0 0.0
    %1117 = vmatpush1.msra.mxu0 0.0
    %1118 = vmatprep.subr.mxu0 0.0
    %1119 = vmatpush1.msra.mxu0 0.0
    %1120 = vmatprep.subr.mxu0 0.0
    %1121 = vmatpush1.msra.mxu0 0.0
    %1122 = vmatprep.subr.mxu0 0.0
    %1123 = vmatpush1.msra.mxu0 0.0
    %1124 = vmatprep.subr.mxu0 0.0
    %1125 = vmatpush1.msra.mxu0 0.0
    %1126 = vmatprep.subr.mxu0 0.0
    %1127 = vmatpush1.msra.mxu0 0.0
    %1128 = vmatprep.subr.mxu0 0.0
    %1129 = vmatpush1.msra.mxu0 0.0
    %1130 = vmatprep.subr.mxu0 0.0
    %1131 = vmatpush1.msra.mxu0 0.0
    %1132 = vmatprep.subr.mxu0 0.0
    %1133 = vmatpush1.msra.mxu0 0.0
    %1134 = vmatprep.subr.mxu0 0.0
    %1135 = vmatpush1.msra.mxu0 0.0
    %1136 = vmatprep.subr.mxu0 0.0
    %1137 = vmatpush1.msra.mxu0 0.0
    %1138 = vmatprep.subr.mxu0 0.0
    %1139 = vmatpush1.msra.mxu0 0.0
    %1140 = vmatprep.subr.mxu0 0.0
    %1141 = vmatpush1.msra.mxu0 0.0
    %1142 = vmatprep.subr.mxu0 0.0
    %1143 = vmatpush1.msra.mxu0 0.0
    %1144 = vmatprep.subr.mxu0 0.0
    %1145 = vmatpush1.msra.mxu0 0.0
    %1146 = vmatprep.subr.mxu0 0.0
    %1147 = vmatpush1.msra.mxu0 0.0
    %1148 = vmatprep.subr.mxu0 0.0
    %1149 = vmatpush1.msra.mxu0 0.0
    %1150 = vmatprep.mubr.f32.mxu0 0.0
    %1151 = vmatmul.mubr.f32.gmra.mrb[0].mxu0 %v185
    %v1152 = vpop.f32.mrb[0].mxu0
    %v1153 = vadd.f32 0.0, %v1152
    %v1154 = vpop.f32.mrb[0].mxu0
    %1155 = vdwg.mxu0
    %v1156 = vadd.f32 %v1085, %v1153
    %v1157 = vmul.f32 %v73, %v1156
    %v1158 = vtanh.pop %v1157
    %v1159 = vmul.f32 %v73, %v1158
    %v1160 = vadd.f32 %v1159, %v75
    %v1161 = vmul.f32 %v1160, 0.0
    %1163 = vrot.lane.b32.xlu0 %v1160, 64
    %v1164 = vpop.permute.xlu0 %1163
    %v1166 = vmul.f32 %v1160, %v1164
    %1168 = vrot.lane.b32.xlu0 %v1166, 32
    %v1169 = vpop.permute.xlu0 %1168
    %v1171 = vadd.f32 %v1161, %v1169
    %v1172 = vtanh.pop %v1171
    %1174 = vrot.lane.b32.xlu0 %v1172, 64
    %v1175 = vpop.permute.xlu0 %1174
    %v1177 = vmul.f32 %v1160, %v1175
    %1179 = vrot.lane.b32.xlu0 %v1177, 32
    %v1180 = vpop.permute.xlu0 %1179
    %1182 = vst.msk [vmem:[#allocation3] sm:$0x3] %vm283, %v1180
    %v1183 = vld [vmem:[#allocation2 + $0x2] sm:$0x3]
    %v1184 = vsel %vm183, %v1180, 0
    %1186 = vmatprep.subr.mxu0 0.0
    %1187 = vmatpush1.msra.mxu0 %v1081
    %1188 = vmatprep.subr.mxu0 0.0
    %1189 = vmatpush1.msra.mxu0 %v1082
    %1190 = vmatprep.subr.mxu0 0.0
    %1191 = vmatpush1.msra.mxu0 %v1083
    %1192 = vmatprep.subr.mxu0 0.0
    %1193 = vmatpush1.msra.mxu0 %v1084
    %1194 = vmatprep.subr.mxu0 0.0
    %1195 = vmatpush1.msra.mxu0 0.0
    %1196 = vmatprep.subr.mxu0 0.0
    %1197 = vmatpush1.msra.mxu0 0.0
    %1198 = vmatprep.subr.mxu0 0.0
    %1199 = vmatpush1.msra.mxu0 0.0
    %1200 = vmatprep.subr.mxu0 0.0
    %1201 = vmatpush1.msra.mxu0 0.0
    %1202 = vmatprep.subr.mxu0 0.0
    %1203 = vmatpush1.msra.mxu0 0.0
    %1204 = vmatprep.subr.mxu0 0.0
    %1205 = vmatpush1.msra.mxu0 0.0
    %1206 = vmatprep.subr.mxu0 0.0
    %1207 = vmatpush1.msra.mxu0 0.0
    %1208 = vmatprep.subr.mxu0 0.0
    %1209 = vmatpush1.msra.mxu0 0.0
    %1210 = vmatprep.subr.mxu0 0.0
    %1211 = vmatpush1.msra.mxu0 0.0
    %1212 = vmatprep.subr.mxu0 0.0
    %1213 = vmatpush1.msra.mxu0 0.0
    %1214 = vmatprep.subr.mxu0 0.0
    %1215 = vmatpush1.msra.mxu0 0.0
    %1216 = vmatprep.subr.mxu0 0.0
    %1217 = vmatpush1.msra.mxu0 0.0
    %1218 = vmatprep.subr.mxu0 0.0
    %1219 = vmatpush1.msra.mxu0 0.0
    %1220 = vmatprep.subr.mxu0 0.0
    %1221 = vmatpush1.msra.mxu0 0.0
    %1222 = vmatprep.subr.mxu0 0.0
    %1223 = vmatpush1.msra.mxu0 0.0
    %1224 = vmatprep.subr.mxu0 0.0
    %1225 = vmatpush1.msra.mxu0 0.0
    %1226 = vmatprep.subr.mxu0 0.0
    %1227 = vmatpush1.msra.mxu0 0.0
    %1228 = vmatprep.subr.mxu0 0.0
    %1229 = vmatpush1.msra.mxu0 0.0
    %1230 = vmatprep.subr.mxu0 0.0
    %1231 = vmatpush1.msra.mxu0 0.0
    %1232 = vmatprep.subr.mxu0 0.0
    %1233 = vmatpush1.msra.mxu0 0.0
    %1234 = vmatprep.subr.mxu0 0.0
    %1235 = vmatpush1.msra.mxu0 0.0
    %1236 = vmatprep.subr.mxu0 0.0
    %1237 = vmatpush1.msra.mxu0 0.0
    %1238 = vmatprep.subr.mxu0 0.0
    %1239 = vmatpush1.msra.mxu0 0.0
    %1240 = vmatprep.subr.mxu0 0.0
    %1241 = vmatpush1.msra.mxu0 0.0
    %1242 = vmatprep.subr.mxu0 0.0
    %1243 = vmatpush1.msra.mxu0 0.0
    %1244 = vmatprep.subr.mxu0 0.0
    %1245 = vmatpush1.msra.mxu0 0.0
    %1246 = vmatprep.subr.mxu0 0.0
    %1247 = vmatpush1.msra.mxu0 0.0
    %1248 = vmatprep.subr.mxu0 0.0
    %1249 = vmatpush1.msra.mxu0 0.0
    %1250 = vmatprep.mubr.f32.mxu0 0.0
    %1251 = vmatmul.mubr.f32.gmra.mrb[0].mxu0 %v1184
    %v1252 = vpop.f32.mrb[0].mxu0
    %v1253 = vadd.f32 0.0, %v1252
    %v1254 = vpop.f32.mrb[0].mxu0
    %1255 = vdwg.mxu0
    %v1256 = vadd.f32 %v1183, %v1253
    %v1257 = vmul.f32 %v73, %v1256
    %v1258 = vtanh.pop %v1257
    %v1259 = vmul.f32 %v73, %v1258
    %v1260 = vadd.f32 %v1259, %v75
    %v1261 = vmul.f32 %v1260, %v1171
    %1263 = vrot.lane.b32.xlu0 %v1260, 64
    %v1264 = vpop.permute.xlu0 %1263
    %v1266 = vmul.f32 %v1260, %v1264
    %1268 = vrot.lane.b32.xlu0 %v1266, 32
    %v1269 = vpop.permute.xlu0 %1268
    %v1271 = vadd.f32 %v1261, %v1269
    %v1272 = vtanh.pop %v1271
    %1274 = vrot.lane.b32.xlu0 %v1272, 64
    %v1275 = vpop.permute.xlu0 %1274
    %v1277 = vmul.f32 %v1260, %v1275
    %1279 = vrot.lane.b32.xlu0 %v1277, 32
    %v1280 = vpop.permute.xlu0 %1279
    %1282 = vst.msk [vmem:[#allocation3 + $0x2] sm:$0x3] %vm283, %v1280
    %v1283 = vld [vmem:[#allocation2 + $0x4] sm:$0x3]
    %v1284 = vsel %vm183, %v1280, 0
    %1286 = vmatprep.subr.mxu0 0.0
    %1287 = vmatpush1.msra.mxu0 %v1081
    %1288 = vmatprep.subr.mxu0 0.0
    %1289 = vmatpush1.msra.mxu0 %v1082
    %1290 = vmatprep.subr.mxu0 0.0
    %1291 = vmatpush1.msra.mxu0 %v1083
    %1292 = vmatprep.subr.mxu0 0.0
    %1293 = vmatpush1.msra.mxu0 %v1084
    %1294 = vmatprep.subr.mxu0 0.0
    %1295 = vmatpush1.msra.mxu0 0.0
    %1296 = vmatprep.subr.mxu0 0.0
    %1297 = vmatpush1.msra.mxu0 0.0
    %1298 = vmatprep.subr.mxu0 0.0
    %1299 = vmatpush1.msra.mxu0 0.0
    %1300 = vmatprep.subr.mxu0 0.0
    %1301 = vmatpush1.msra.mxu0 0.0
    %1302 = vmatprep.subr.mxu0 0.0
    %1303 = vmatpush1.msra.mxu0 0.0
    %1304 = vmatprep.subr.mxu0 0.0
    %1305 = vmatpush1.msra.mxu0 0.0
    %1306 = vmatprep.subr.mxu0 0.0
    %1307 = vmatpush1.msra.mxu0 0.0
    %1308 = vmatprep.subr.mxu0 0.0
    %1309 = vmatpush1.msra.mxu0 0.0
    %1310 = vmatprep.subr.mxu0 0.0
    %1311 = vmatpush1.msra.mxu0 0.0
    %1312 = vmatprep.subr.mxu0 0.0
    %1313 = vmatpush1.msra.mxu0 0.0
    %1314 = vmatprep.subr.mxu0 0.0
    %1315 = vmatpush1.msra.mxu0 0.0
    %1316 = vmatprep.subr.mxu0 0.0
    %1317 = vmatpush1.msra.mxu0 0.0
    %1318 = vmatprep.subr.mxu0 0.0
    %1319 = vmatpush1.msra.mxu0 0.0
    %1320 = vmatprep.subr.mxu0 0.0
    %1321 = vmatpush1.msra.mxu0 0.0
    %1322 = vmatprep.subr.mxu0 0.0
    %1323 = vmatpush1.msra.mxu0 0.0
    %1324 = vmatprep.subr.mxu0 0.0
    %1325 = vmatpush1.msra.mxu0 0.0
    %1326 = vmatprep.subr.mxu0 0.0
    %1327 = vmatpush1.msra.mxu0 0.0
    %1328 = vmatprep.subr.mxu0 0.0
    %1329 = vmatpush1.msra.mxu0 0.0
    %1330 = vmatprep.subr.mxu0 0.0
    %1331 = vmatpush1.msra.mxu0 0.0
    %1332 = vmatprep.subr.mxu0 0.0
    %1333 = vmatpush1.msra.mxu0 0.0
    %1334 = vmatprep.subr.mxu0 0.0
    %1335 = vmatpush1.msra.mxu0 0.0
    %1336 = vmatprep.subr.mxu0 0.0
    %1337 = vmatpush1.msra.mxu0 0.0
    %1338 = vmatprep.subr.mxu0 0.0
    %1339 = vmatpush1.msra.mxu0 0.0
    %1340 = vmatprep.subr.mxu0 0.0
    %1341 = vmatpush1.msra.mxu0 0.0
    %1342 = vmatprep.subr.mxu0 0.0
    %1343 = vmatpush1.msra.mxu0 0.0
    %1344 = vmatprep.subr.mxu0 0.0
    %1345 = vmatpush1.msra.mxu0 0.0
    %1346 = vmatprep.subr.mxu0 0.0
    %1347 = vmatpush1.msra.mxu0 0.0
    %1348 = vmatprep.subr.mxu0 0.0
    %1349 = vmatpush1.msra.mxu0 0.0
    %1350 = vmatprep.mubr.f32.mxu0 0.0
    %1351 = vmatmul.mubr.f32.gmra.mrb[0].mxu0 %v1284
    %v1352 = vpop.f32.mrb[0].mxu0
    %v1353 = vadd.f32 0.0, %v1352
    %v1354 = vpop.f32.mrb[0].mxu0
    %1355 = vdwg.mxu0
    %v1356 = vadd.f32 %v1283, %v1353
    %v1357 = vmul.f32 %v73, %v1356
    %v1358 = vtanh.pop %v1357
    %v1359 = vmul.f32 %v73, %v1358
    %v1360 = vadd.f32 %v1359, %v75
    %v1361 = vmul.f32 %v1360, %v1271
    %1363 = vrot.lane.b32.xlu0 %v1360, 64
    %v1364 = vpop.permute.xlu0 %1363
    %v1366 = vmul.f32 %v1360, %v1364
    %1368 = vrot.lane.b32.xlu0 %v1366, 32
    %v1369 = vpop.permute.xlu0 %1368
    %v1371 = vadd.f32 %v1361, %v1369
    %v1372 = vtanh.pop %v1371
    %1374 = vrot.lane.b32.xlu0 %v1372, 64
    %v1375 = vpop.permute.xlu0 %1374
    %v1377 = vmul.f32 %v1360, %v1375
    %1379 = vrot.lane.b32.xlu0 %v1377, 32
    %v1380 = vpop.permute.xlu0 %1379
    %1382 = vst.msk [vmem:[#allocation3 + $0x4] sm:$0x3] %vm283, %v1380
    %v1383 = vld [vmem:[#allocation2 + $0x6] sm:$0x3]
    %v1384 = vsel %vm183, %v1380, 0
    %1386 = vmatprep.subr.mxu0 0.0
    %1387 = vmatpush1.msra.mxu0 %v1081
    %1388 = vmatprep.subr.mxu0 0.0
    %1389 = vmatpush1.msra.mxu0 %v1082
    %1390 = vmatprep.subr.mxu0 0.0
    %1391 = vmatpush1.msra.mxu0 %v1083
    %1392 = vmatprep.subr.mxu0 0.0
    %1393 = vmatpush1.msra.mxu0 %v1084
    %1394 = vmatprep.subr.mxu0 0.0
    %1395 = vmatpush1.msra.mxu0 0.0
    %1396 = vmatprep.subr.mxu0 0.0
    %1397 = vmatpush1.msra.mxu0 0.0
    %1398 = vmatprep.subr.mxu0 0.0
    %1399 = vmatpush1.msra.mxu0 0.0
    %1400 = vmatprep.subr.mxu0 0.0
    %1401 = vmatpush1.msra.mxu0 0.0
    %1402 = vmatprep.subr.mxu0 0.0
    %1403 = vmatpush1.msra.mxu0 0.0
    %1404 = vmatprep.subr.mxu0 0.0
    %1405 = vmatpush1.msra.mxu0 0.0
    %1406 = vmatprep.subr.mxu0 0.0
    %1407 = vmatpush1.msra.mxu0 0.0
    %1408 = vmatprep.subr.mxu0 0.0
    %1409 = vmatpush1.msra.mxu0 0.0
    %1410 = vmatprep.subr.mxu0 0.0
    %1411 = vmatpush1.msra.mxu0 0.0
    %1412 = vmatprep.subr.mxu0 0.0
    %1413 = vmatpush1.msra.mxu0 0.0
    %1414 = vmatprep.subr.mxu0 0.0
    %1415 = vmatpush1.msra.mxu0 0.0
    %1416 = vmatprep.subr.mxu0 0.0
    %1417 = vmatpush1.msra.mxu0 0.0
    %1418 = vmatprep.subr.mxu0 0.0
    %1419 = vmatpush1.msra.mxu0 0.0
    %1420 = vmatprep.subr.mxu0 0.0
    %1421 = vmatpush1.msra.mxu0 0.0
    %1422 = vmatprep.subr.mxu0 0.0
    %1423 = vmatpush1.msra.mxu0 0.0
    %1424 = vmatprep.subr.mxu0 0.0
    %1425 = vmatpush1.msra.mxu0 0.0
    %1426 = vmatprep.subr.mxu0 0.0
    %1427 = vmatpush1.msra.mxu0 0.0
    %1428 = vmatprep.subr.mxu0 0.0
    %1429 = vmatpush1.msra.mxu0 0.0
    %1430 = vmatprep.subr.mxu0 0.0
    %1431 = vmatpush1.msra.mxu0 0.0
    %1432 = vmatprep.subr.mxu0 0.0
    %1433 = vmatpush1.msra.mxu0 0.0
    %1434 = vmatprep.subr.mxu0 0.0
    %1435 = vmatpush1.msra.mxu0 0.0
    %1436 = vmatprep.subr.mxu0 0.0
    %1437 = vmatpush1.msra.mxu0 0.0
    %1438 = vmatprep.subr.mxu0 0.0
    %1439 = vmatpush1.msra.mxu0 0.0
    %1440 = vmatprep.subr.mxu0 0.0
    %1441 = vmatpush1.msra.mxu0 0.0
    %1442 = vmatprep.subr.mxu0 0.0
    %1443 = vmatpush1.msra.mxu0 0.0
    %1444 = vmatprep.subr.mxu0 0.0
    %1445 = vmatpush1.msra.mxu0 0.0
    %1446 = vmatprep.subr.mxu0 0.0
    %1447 = vmatpush1.msra.mxu0 0.0
    %1448 = vmatprep.subr.mxu0 0.0
    %1449 = vmatpush1.msra.mxu0 0.0
    %1450 = vmatprep.mubr.f32.mxu0 0.0
    %1451 = vmatmul.mubr.f32.gmra.mrb[0].mxu0 %v1384
    %v1452 = vpop.f32.mrb[0].mxu0
    %v1453 = vadd.f32 0.0, %v1452
    %v1454 = vpop.f32.mrb[0].mxu0
    %1455 = vdwg.mxu0
    %v1456 = vadd.f32 %v1383, %v1453
    %v1457 = vmul.f32 %v73, %v1456
    %v1458 = vtanh.pop %v1457
    %v1459 = vmul.f32 %v73, %v1458
    %v1460 = vadd.f32 %v1459, %v75
    %v1461 = vmul.f32 %v1460, %v1371
    %1463 = vrot.lane.b32.xlu0 %v1460, 64
    %v1464 = vpop.permute.xlu0 %1463
    %v1466 = vmul.f32 %v1460, %v1464
    %1468 = vrot.lane.b32.xlu0 %v1466, 32
    %v1469 = vpop.permute.xlu0 %1468
    %v1471 = vadd.f32 %v1461, %v1469
    %v1472 = vtanh.pop %v1471
    %1474 = vrot.lane.b32.xlu0 %v1472, 64
    %v1475 = vpop.permute.xlu0 %1474
    %v1477 = vmul.f32 %v1460, %v1475
    %1479 = vrot.lane.b32.xlu0 %v1477, 32
    %v1480 = vpop.permute.xlu0 %1479
    %1482 = vst.msk [vmem:[#allocation3 + $0x6] sm:$0x3] %vm283, %v1480
    %v1483 = vld [vmem:[#allocation2 + $0x8] sm:$0x3]
    %v1484 = vsel %vm183, %v1480, 0
    %1486 = vmatprep.subr.mxu0 0.0
    %1487 = vmatpush1.msra.mxu0 %v1081
    %1488 = vmatprep.subr.mxu0 0.0
    %1489 = vmatpush1.msra.mxu0 %v1082
    %1490 = vmatprep.subr.mxu0 0.0
    %1491 = vmatpush1.msra.mxu0 %v1083
    %1492 = vmatprep.subr.mxu0 0.0
    %1493 = vmatpush1.msra.mxu0 %v1084
    %1494 = vmatprep.subr.mxu0 0.0
    %1495 = vmatpush1.msra.mxu0 0.0
    %1496 = vmatprep.subr.mxu0 0.0
    %1497 = vmatpush1.msra.mxu0 0.0
    %1498 = vmatprep.subr.mxu0 0.0
    %1499 = vmatpush1.msra.mxu0 0.0
    %1500 = vmatprep.subr.mxu0 0.0
    %1501 = vmatpush1.msra.mxu0 0.0
    %1502 = vmatprep.subr.mxu0 0.0
    %1503 = vmatpush1.msra.mxu0 0.0
    %1504 = vmatprep.subr.mxu0 0.0
    %1505 = vmatpush1.msra.mxu0 0.0
    %1506 = vmatprep.subr.mxu0 0.0
    %1507 = vmatpush1.msra.mxu0 0.0
    %1508 = vmatprep.subr.mxu0 0.0
    %1509 = vmatpush1.msra.mxu0 0.0
    %1510 = vmatprep.subr.mxu0 0.0
    %1511 = vmatpush1.msra.mxu0 0.0
    %1512 = vmatprep.subr.mxu0 0.0
    %1513 = vmatpush1.msra.mxu0 0.0
    %1514 = vmatprep.subr.mxu0 0.0
    %1515 = vmatpush1.msra.mxu0 0.0
    %1516 = vmatprep.subr.mxu0 0.0
    %1517 = vmatpush1.msra.mxu0 0.0
    %1518 = vmatprep.subr.mxu0 0.0
    %1519 = vmatpush1.msra.mxu0 0.0
    %1520 = vmatprep.subr.mxu0 0.0
    %1521 = vmatpush1.msra.mxu0 0.0
    %1522 = vmatprep.subr.mxu0 0.0
    %1523 = vmatpush1.msra.mxu0 0.0
    %1524 = vmatprep.subr.mxu0 0.0
    %1525 = vmatpush1.msra.mxu0 0.0
    %1526 = vmatprep.subr.mxu0 0.0
    %1527 = vmatpush1.msra.mxu0 0.0
    %1528 = vmatprep.subr.mxu0 0.0
    %1529 = vmatpush1.msra.mxu0 0.0
    %1530 = vmatprep.subr.mxu0 0.0
    %1531 = vmatpush1.msra.mxu0 0.0
    %1532 = vmatprep.subr.mxu0 0.0
    %1533 = vmatpush1.msra.mxu0 0.0
    %1534 = vmatprep.subr.mxu0 0.0
    %1535 = vmatpush1.msra.mxu0 0.0
    %1536 = vmatprep.subr.mxu0 0.0
    %1537 = vmatpush1.msra.mxu0 0.0
    %1538 = vmatprep.subr.mxu0 0.0
    %1539 = vmatpush1.msra.mxu0 0.0
    %1540 = vmatprep.subr.mxu0 0.0
    %1541 = vmatpush1.msra.mxu0 0.0
    %1542 = vmatprep.subr.mxu0 0.0
    %1543 = vmatpush1.msra.mxu0 0.0
    %1544 = vmatprep.subr.mxu0 0.0
    %1545 = vmatpush1.msra.mxu0 0.0
    %1546 = vmatprep.subr.mxu0 0.0
    %1547 = vmatpush1.msra.mxu0 0.0
    %1548 = vmatprep.subr.mxu0 0.0
    %1549 = vmatpush1.msra.mxu0 0.0
    %1550 = vmatprep.mubr.f32.mxu0 0.0
    %1551 = vmatmul.mubr.f32.gmra.mrb[0].mxu0 %v1484
    %v1552 = vpop.f32.mrb[0].mxu0
    %v1553 = vadd.f32 0.0, %v1552
    %v1554 = vpop.f32.mrb[0].mxu0
    %1555 = vdwg.mxu0
    %v1556 = vadd.f32 %v1483, %v1553
    %v1557 = vmul.f32 %v73, %v1556
    %v1558 = vtanh.pop %v1557
    %v1559 = vmul.f32 %v73, %v1558
    %v1560 = vadd.f32 %v1559, %v75
    %v1561 = vmul.f32 %v1560, %v1471
    %1563 = vrot.lane.b32.xlu0 %v1560, 64
    %v1564 = vpop.permute.xlu0 %1563
    %v1566 = vmul.f32 %v1560, %v1564
    %1568 = vrot.lane.b32.xlu0 %v1566, 32
    %v1569 = vpop.permute.xlu0 %1568
    %v1571 = vadd.f32 %v1561, %v1569
    %v1572 = vtanh.pop %v1571
    %1574 = vrot.lane.b32.xlu0 %v1572, 64
    %v1575 = vpop.permute.xlu0 %1574
    %v1577 = vmul.f32 %v1560, %v1575
    %1579 = vrot.lane.b32.xlu0 %v1577, 32
    %v1580 = vpop.permute.xlu0 %1579
    %1582 = vst.msk [vmem:[#allocation3 + $0x8] sm:$0x3] %vm283, %v1580
    %v1583 = vld [vmem:[#allocation2 + $0xa] sm:$0x3]
    %v1584 = vsel %vm183, %v1580, 0
    %1586 = vmatprep.subr.mxu0 0.0
    %1587 = vmatpush1.msra.mxu0 %v1081
    %1588 = vmatprep.subr.mxu0 0.0
    %1589 = vmatpush1.msra.mxu0 %v1082
    %1590 = vmatprep.subr.mxu0 0.0
    %1591 = vmatpush1.msra.mxu0 %v1083
    %1592 = vmatprep.subr.mxu0 0.0
    %1593 = vmatpush1.msra.mxu0 %v1084
    %1594 = vmatprep.subr.mxu0 0.0
    %1595 = vmatpush1.msra.mxu0 0.0
    %1596 = vmatprep.subr.mxu0 0.0
    %1597 = vmatpush1.msra.mxu0 0.0
    %1598 = vmatprep.subr.mxu0 0.0
    %1599 = vmatpush1.msra.mxu0 0.0
    %1600 = vmatprep.subr.mxu0 0.0
    %1601 = vmatpush1.msra.mxu0 0.0
    %1602 = vmatprep.subr.mxu0 0.0
    %1603 = vmatpush1.msra.mxu0 0.0
    %1604 = vmatprep.subr.mxu0 0.0
    %1605 = vmatpush1.msra.mxu0 0.0
    %1606 = vmatprep.subr.mxu0 0.0
    %1607 = vmatpush1.msra.mxu0 0.0
    %1608 = vmatprep.subr.mxu0 0.0
    %1609 = vmatpush1.msra.mxu0 0.0
    %1610 = vmatprep.subr.mxu0 0.0
    %1611 = vmatpush1.msra.mxu0 0.0
    %1612 = vmatprep.subr.mxu0 0.0
    %1613 = vmatpush1.msra.mxu0 0.0
    %1614 = vmatprep.subr.mxu0 0.0
    %1615 = vmatpush1.msra.mxu0 0.0
    %1616 = vmatprep.subr.mxu0 0.0
    %1617 = vmatpush1.msra.mxu0 0.0
    %1618 = vmatprep.subr.mxu0 0.0
    %1619 = vmatpush1.msra.mxu0 0.0
    %1620 = vmatprep.subr.mxu0 0.0
    %1621 = vmatpush1.msra.mxu0 0.0
    %1622 = vmatprep.subr.mxu0 0.0
    %1623 = vmatpush1.msra.mxu0 0.0
    %1624 = vmatprep.subr.mxu0 0.0
    %1625 = vmatpush1.msra.mxu0 0.0
    %1626 = vmatprep.subr.mxu0 0.0
    %1627 = vmatpush1.msra.mxu0 0.0
    %1628 = vmatprep.subr.mxu0 0.0
    %1629 = vmatpush1.msra.mxu0 0.0
    %1630 = vmatprep.subr.mxu0 0.0
    %1631 = vmatpush1.msra.mxu0 0.0
    %1632 = vmatprep.subr.mxu0 0.0
    %1633 = vmatpush1.msra.mxu0 0.0
    %1634 = vmatprep.subr.mxu0 0.0
    %1635 = vmatpush1.msra.mxu0 0.0
    %1636 = vmatprep.subr.mxu0 0.0
    %1637 = vmatpush1.msra.mxu0 0.0
    %1638 = vmatprep.subr.mxu0 0.0
    %1639 = vmatpush1.msra.mxu0 0.0
    %1640 = vmatprep.subr.mxu0 0.0
    %1641 = vmatpush1.msra.mxu0 0.0
    %1642 = vmatprep.subr.mxu0 0.0
    %1643 = vmatpush1.msra.mxu0 0.0
    %1644 = vmatprep.subr.mxu0 0.0
    %1645 = vmatpush1.msra.mxu0 0.0
    %1646 = vmatprep.subr.mxu0 0.0
    %1647 = vmatpush1.msra.mxu0 0.0
    %1648 = vmatprep.subr.mxu0 0.0
    %1649 = vmatpush1.msra.mxu0 0.0
    %1650 = vmatprep.mubr.f32.mxu0 0.0
    %1651 = vmatmul.mubr.f32.gmra.mrb[0].mxu0 %v1584
    %v1652 = vpop.f32.mrb[0].mxu0
    %v1653 = vadd.f32 0.0, %v1652
    %v1654 = vpop.f32.mrb[0].mxu0
    %1655 = vdwg.mxu0
    %v1656 = vadd.f32 %v1583, %v1653
    %v1657 = vmul.f32 %v73, %v1656
    %v1658 = vtanh.pop %v1657
    %v1659 = vmul.f32 %v73, %v1658
    %v1660 = vadd.f32 %v1659, %v75
    %v1661 = vmul.f32 %v1660, %v1571
    %1663 = vrot.lane.b32.xlu0 %v1660, 64
    %v1664 = vpop.permute.xlu0 %1663
    %v1666 = vmul.f32 %v1660, %v1664
    %1668 = vrot.lane.b32.xlu0 %v1666, 32
    %v1669 = vpop.permute.xlu0 %1668
    %v1671 = vadd.f32 %v1661, %v1669
    %v1672 = vtanh.pop %v1671
    %1674 = vrot.lane.b32.xlu0 %v1672, 64
    %v1675 = vpop.permute.xlu0 %1674
    %v1677 = vmul.f32 %v1660, %v1675
    %1679 = vrot.lane.b32.xlu0 %v1677, 32
    %v1680 = vpop.permute.xlu0 %1679
    %1682 = vst.msk [vmem:[#allocation3 + $0xa] sm:$0x3] %vm283, %v1680
    %v1683 = vld [vmem:[#allocation2 + $0xc] sm:$0x3]
    %v1684 = vsel %vm183, %v1680, 0
    %1686 = vmatprep.subr.mxu0 0.0
    %1687 = vmatpush1.msra.mxu0 %v1081
    %1688 = vmatprep.subr.mxu0 0.0
    %1689 = vmatpush1.msra.mxu0 %v1082
    %1690 = vmatprep.subr.mxu0 0.0
    %1691 = vmatpush1.msra.mxu0 %v1083
    %1692 = vmatprep.subr.mxu0 0.0
    %1693 = vmatpush1.msra.mxu0 %v1084
    %1694 = vmatprep.subr.mxu0 0.0
    %1695 = vmatpush1.msra.mxu0 0.0
    %1696 = vmatprep.subr.mxu0 0.0
    %1697 = vmatpush1.msra.mxu0 0.0
    %1698 = vmatprep.subr.mxu0 0.0
    %1699 = vmatpush1.msra.mxu0 0.0
    %1700 = vmatprep.subr.mxu0 0.0
    %1701 = vmatpush1.msra.mxu0 0.0
    %1702 = vmatprep.subr.mxu0 0.0
    %1703 = vmatpush1.msra.mxu0 0.0
    %1704 = vmatprep.subr.mxu0 0.0
    %1705 = vmatpush1.msra.mxu0 0.0
    %1706 = vmatprep.subr.mxu0 0.0
    %1707 = vmatpush1.msra.mxu0 0.0
    %1708 = vmatprep.subr.mxu0 0.0
    %1709 = vmatpush1.msra.mxu0 0.0
    %1710 = vmatprep.subr.mxu0 0.0
    %1711 = vmatpush1.msra.mxu0 0.0
    %1712 = vmatprep.subr.mxu0 0.0
    %1713 = vmatpush1.msra.mxu0 0.0
    %1714 = vmatprep.subr.mxu0 0.0
    %1715 = vmatpush1.msra.mxu0 0.0
    %1716 = vmatprep.subr.mxu0 0.0
    %1717 = vmatpush1.msra.mxu0 0.0
    %1718 = vmatprep.subr.mxu0 0.0
    %1719 = vmatpush1.msra.mxu0 0.0
    %1720 = vmatprep.subr.mxu0 0.0
    %1721 = vmatpush1.msra.mxu0 0.0
    %1722 = vmatprep.subr.mxu0 0.0
    %1723 = vmatpush1.msra.mxu0 0.0
    %1724 = vmatprep.subr.mxu0 0.0
    %1725 = vmatpush1.msra.mxu0 0.0
    %1726 = vmatprep.subr.mxu0 0.0
    %1727 = vmatpush1.msra.mxu0 0.0
    %1728 = vmatprep.subr.mxu0 0.0
    %1729 = vmatpush1.msra.mxu0 0.0
    %1730 = vmatprep.subr.mxu0 0.0
    %1731 = vmatpush1.msra.mxu0 0.0
    %1732 = vmatprep.subr.mxu0 0.0
    %1733 = vmatpush1.msra.mxu0 0.0
    %1734 = vmatprep.subr.mxu0 0.0
    %1735 = vmatpush1.msra.mxu0 0.0
    %1736 = vmatprep.subr.mxu0 0.0
    %1737 = vmatpush1.msra.mxu0 0.0
    %1738 = vmatprep.subr.mxu0 0.0
    %1739 = vmatpush1.msra.mxu0 0.0
    %1740 = vmatprep.subr.mxu0 0.0
    %1741 = vmatpush1.msra.mxu0 0.0
    %1742 = vmatprep.subr.mxu0 0.0
    %1743 = vmatpush1.msra.mxu0 0.0
    %1744 = vmatprep.subr.mxu0 0.0
    %1745 = vmatpush1.msra.mxu0 0.0
    %1746 = vmatprep.subr.mxu0 0.0
    %1747 = vmatpush1.msra.mxu0 0.0
    %1748 = vmatprep.subr.mxu0 0.0
    %1749 = vmatpush1.msra.mxu0 0.0
    %1750 = vmatprep.mubr.f32.mxu0 0.0
    %1751 = vmatmul.mubr.f32.gmra.mrb[0].mxu0 %v1684
    %v1752 = vpop.f32.mrb[0].mxu0
    %v1753 = vadd.f32 0.0, %v1752
    %v1754 = vpop.f32.mrb[0].mxu0
    %1755 = vdwg.mxu0
    %v1756 = vadd.f32 %v1683, %v1753
    %v1757 = vmul.f32 %v73, %v1756
    %v1758 = vtanh.pop %v1757
    %v1759 = vmul.f32 %v73, %v1758
    %v1760 = vadd.f32 %v1759, %v75
    %v1761 = vmul.f32 %v1760, %v1671
    %1763 = vrot.lane.b32.xlu0 %v1760, 64
    %v1764 = vpop.permute.xlu0 %1763
    %v1766 = vmul.f32 %v1760, %v1764
    %1768 = vrot.lane.b32.xlu0 %v1766, 32
    %v1769 = vpop.permute.xlu0 %1768
    %v1771 = vadd.f32 %v1761, %v1769
    %v1772 = vtanh.pop %v1771
    %1774 = vrot.lane.b32.xlu0 %v1772, 64
    %v1775 = vpop.permute.xlu0 %1774
    %v1777 = vmul.f32 %v1760, %v1775
    %1779 = vrot.lane.b32.xlu0 %v1777, 32
    %v1780 = vpop.permute.xlu0 %1779
    %1782 = vst.msk [vmem:[#allocation3 + $0xc] sm:$0x3] %vm283, %v1780
    %v1783 = vld [vmem:[#allocation2 + $0xe] sm:$0x3]
    %v1784 = vsel %vm183, %v1780, 0
    %1786 = vmatprep.subr.mxu0 0.0
    %1787 = vmatpush1.msra.mxu0 %v1081
    %1788 = vmatprep.subr.mxu0 0.0
    %1789 = vmatpush1.msra.mxu0 %v1082
    %1790 = vmatprep.subr.mxu0 0.0
    %1791 = vmatpush1.msra.mxu0 %v1083
    %1792 = vmatprep.subr.mxu0 0.0
    %1793 = vmatpush1.msra.mxu0 %v1084
    %1794 = vmatprep.subr.mxu0 0.0
    %1795 = vmatpush1.msra.mxu0 0.0
    %1796 = vmatprep.subr.mxu0 0.0
    %1797 = vmatpush1.msra.mxu0 0.0
    %1798 = vmatprep.subr.mxu0 0.0
    %1799 = vmatpush1.msra.mxu0 0.0
    %1800 = vmatprep.subr.mxu0 0.0
    %1801 = vmatpush1.msra.mxu0 0.0
    %1802 = vmatprep.subr.mxu0 0.0
    %1803 = vmatpush1.msra.mxu0 0.0
    %1804 = vmatprep.subr.mxu0 0.0
    %1805 = vmatpush1.msra.mxu0 0.0
    %1806 = vmatprep.subr.mxu0 0.0
    %1807 = vmatpush1.msra.mxu0 0.0
    %1808 = vmatprep.subr.mxu0 0.0
    %1809 = vmatpush1.msra.mxu0 0.0
    %1810 = vmatprep.subr.mxu0 0.0
    %1811 = vmatpush1.msra.mxu0 0.0
    %1812 = vmatprep.subr.mxu0 0.0
    %1813 = vmatpush1.msra.mxu0 0.0
    %1814 = vmatprep.subr.mxu0 0.0
    %1815 = vmatpush1.msra.mxu0 0.0
    %1816 = vmatprep.subr.mxu0 0.0
    %1817 = vmatpush1.msra.mxu0 0.0
    %1818 = vmatprep.subr.mxu0 0.0
    %1819 = vmatpush1.msra.mxu0 0.0
    %1820 = vmatprep.subr.mxu0 0.0
    %1821 = vmatpush1.msra.mxu0 0.0
    %1822 = vmatprep.subr.mxu0 0.0
    %1823 = vmatpush1.msra.mxu0 0.0
    %1824 = vmatprep.subr.mxu0 0.0
    %1825 = vmatpush1.msra.mxu0 0.0
    %1826 = vmatprep.subr.mxu0 0.0
    %1827 = vmatpush1.msra.mxu0 0.0
    %1828 = vmatprep.subr.mxu0 0.0
    %1829 = vmatpush1.msra.mxu0 0.0
    %1830 = vmatprep.subr.mxu0 0.0
    %1831 = vmatpush1.msra.mxu0 0.0
    %1832 = vmatprep.subr.mxu0 0.0
    %1833 = vmatpush1.msra.mxu0 0.0
    %1834 = vmatprep.subr.mxu0 0.0
    %1835 = vmatpush1.msra.mxu0 0.0
    %1836 = vmatprep.subr.mxu0 0.0
    %1837 = vmatpush1.msra.mxu0 0.0
    %1838 = vmatprep.subr.mxu0 0.0
    %1839 = vmatpush1.msra.mxu0 0.0
    %1840 = vmatprep.subr.mxu0 0.0
    %1841 = vmatpush1.msra.mxu0 0.0
    %1842 = vmatprep.subr.mxu0 0.0
    %1843 = vmatpush1.msra.mxu0 0.0
    %1844 = vmatprep.subr.mxu0 0.0
    %1845 = vmatpush1.msra.mxu0 0.0
    %1846 = vmatprep.subr.mxu0 0.0
    %1847 = vmatpush1.msra.mxu0 0.0
    %1848 = vmatprep.subr.mxu0 0.0
    %1849 = vmatpush1.msra.mxu0 0.0
    %1850 = vmatprep.mubr.f32.mxu0 0.0
    %1851 = vmatmul.mubr.f32.gmra.mrb[0].mxu0 %v1784
    %v1852 = vpop.f32.mrb[0].mxu0
    %v1853 = vadd.f32 0.0, %v1852
    %v1854 = vpop.f32.mrb[0].mxu0
    %1855 = vdwg.mxu0
    %v1856 = vadd.f32 %v1783, %v1853
    %v1857 = vmul.f32 %v73, %v1856
    %v1858 = vtanh.pop %v1857
    %v1859 = vmul.f32 %v73, %v1858
    %v1860 = vadd.f32 %v1859, %v75
    %v1861 = vmul.f32 %v1860, %v1771
    %1863 = vrot.lane.b32.xlu0 %v1860, 64
    %v1864 = vpop.permute.xlu0 %1863
    %v1866 = vmul.f32 %v1860, %v1864
    %1868 = vrot.lane.b32.xlu0 %v1866, 32
    %v1869 = vpop.permute.xlu0 %1868
    %v1871 = vadd.f32 %v1861, %v1869
    %v1872 = vtanh.pop %v1871
    %1874 = vrot.lane.b32.xlu0 %v1872, 64
    %v1875 = vpop.permute.xlu0 %1874
    %v1877 = vmul.f32 %v1860, %v1875
    %1879 = vrot.lane.b32.xlu0 %v1877, 32
    %v1880 = vpop.permute.xlu0 %1879
    %1882 = vst.msk [vmem:[#allocation3 + $0xe] sm:$0x3] %vm283, %v1880
    %v1883 = vld [vmem:[#allocation3] sm:$0xff]
    %v1884 = vld [vmem:[#allocation3 + $0x8] sm:$0xff]
    %vm1885 = vcmp.ge.f32.partialorder %v1883, 0.0
    %vm1886 = vcmp.ge.f32.partialorder %v1884, 0.0
    %v1887 = vmul.f32 %v1883, 0.01
    %v1888 = vmul.f32 %v1884, 0.01
    %v1889 = vsel %vm1885, %v1883, %v1887
    %v1890 = vsel %vm1886, %v1884, %v1888
    %v1891 = vld [vmem:[%s7] sm:$0xff]
    %v1892 = vld [vmem:[%s7 + $0x8] sm:$0xff]
    %v1893 = vld [vmem:[%s7 + $0x10] sm:$0xff]
    %v1894 = vld [vmem:[%s7 + $0x18] sm:$0xff]
    %v1896 = vsel %vm183, %v1889, 0
    %v1899 = vsel %vm183, %v1890, 0
    %1901 = vmatprep.subr.mxu0 0.0
    %1902 = vmatpush1.msra.mxu0 %v1891
    %1903 = vmatprep.subr.mxu0 0.0
    %1904 = vmatpush1.msra.mxu0 %v1892
    %1905 = vmatprep.subr.mxu0 0.0
    %1906 = vmatpush1.msra.mxu0 %v1893
    %1907 = vmatprep.subr.mxu0 0.0
    %1908 = vmatpush1.msra.mxu0 %v1894
    %1909 = vmatprep.subr.mxu0 0.0
    %1910 = vmatpush1.msra.mxu0 0.0
    %1911 = vmatprep.subr.mxu0 0.0
    %1912 = vmatpush1.msra.mxu0 0.0
    %1913 = vmatprep.subr.mxu0 0.0
    %1914 = vmatpush1.msra.mxu0 0.0
    %1915 = vmatprep.subr.mxu0 0.0
    %1916 = vmatpush1.msra.mxu0 0.0
    %1917 = vmatprep.subr.mxu0 0.0
    %1918 = vmatpush1.msra.mxu0 0.0
    %1919 = vmatprep.subr.mxu0 0.0
    %1920 = vmatpush1.msra.mxu0 0.0
    %1921 = vmatprep.subr.mxu0 0.0
    %1922 = vmatpush1.msra.mxu0 0.0
    %1923 = vmatprep.subr.mxu0 0.0
    %1924 = vmatpush1.msra.mxu0 0.0
    %1925 = vmatprep.subr.mxu0 0.0
    %1926 = vmatpush1.msra.mxu0 0.0
    %1927 = vmatprep.subr.mxu0 0.0
    %1928 = vmatpush1.msra.mxu0 0.0
    %1929 = vmatprep.subr.mxu0 0.0
    %1930 = vmatpush1.msra.mxu0 0.0
    %1931 = vmatprep.subr.mxu0 0.0
    %1932 = vmatpush1.msra.mxu0 0.0
    %1933 = vmatprep.subr.mxu0 0.0
    %1934 = vmatpush1.msra.mxu0 0.0
    %1935 = vmatprep.subr.mxu0 0.0
    %1936 = vmatpush1.msra.mxu0 0.0
    %1937 = vmatprep.subr.mxu0 0.0
    %1938 = vmatpush1.msra.mxu0 0.0
    %1939 = vmatprep.subr.mxu0 0.0
    %1940 = vmatpush1.msra.mxu0 0.0
    %1941 = vmatprep.subr.mxu0 0.0
    %1942 = vmatpush1.msra.mxu0 0.0
    %1943 = vmatprep.subr.mxu0 0.0
    %1944 = vmatpush1.msra.mxu0 0.0
    %1945 = vmatprep.subr.mxu0 0.0
    %1946 = vmatpush1.msra.mxu0 0.0
    %1947 = vmatprep.subr.mxu0 0.0
    %1948 = vmatpush1.msra.mxu0 0.0
    %1949 = vmatprep.subr.mxu0 0.0
    %1950 = vmatpush1.msra.mxu0 0.0
    %1951 = vmatprep.subr.mxu0 0.0
    %1952 = vmatpush1.msra.mxu0 0.0
    %1953 = vmatprep.subr.mxu0 0.0
    %1954 = vmatpush1.msra.mxu0 0.0
    %1955 = vmatprep.subr.mxu0 0.0
    %1956 = vmatpush1.msra.mxu0 0.0
    %1957 = vmatprep.subr.mxu0 0.0
    %1958 = vmatpush1.msra.mxu0 0.0
    %1959 = vmatprep.subr.mxu0 0.0
    %1960 = vmatpush1.msra.mxu0 0.0
    %1961 = vmatprep.subr.mxu0 0.0
    %1962 = vmatpush1.msra.mxu0 0.0
    %1963 = vmatprep.subr.mxu0 0.0
    %1964 = vmatpush1.msra.mxu0 0.0
    %1965 = vmatprep.mubr.f32.mxu0 0.0
    %1966 = vmatmul.mubr.f32.gmra.mrb[0].mxu0 %v1896
    %v1967 = vpop.f32.mrb[0].mxu0
    %v1968 = vadd.f32 0.0, %v1967
    %v1969 = vpop.f32.mrb[0].mxu0
    %1970 = vmatprep.mubr.f32.mxu0 0.0
    %1971 = vmatmul.mubr.f32.gmra.mrb[0].mxu0 %v1899
    %v1972 = vpop.f32.mrb[0].mxu0
    %v1973 = vadd.f32 0.0, %v1972
    %v1974 = vpop.f32.mrb[0].mxu0
    %1975 = vdwg.mxu0
    %v1976 = vlaneseq
    %v1977 = vshrl.u32 %v1976, 7
    %v1978 = vadd.s32 %v1977, 8
    %vm1979 = vcmp.lt.s32.totalorder %v1977, 0
    %v1980 = vsub.s32 0, %v1977
    %v1981 = vsel %vm1979, %v1980, %v1977
    %v1982 = vshrl.u32 %v1981, 1
    %v1983 = vand.u32 %v1981, 1
    %v1984 = vsub.s32 0, %v1983
    %v1985 = vsel %vm1979, %v1984, %v1983
    %vm1986 = vcmp.lt.s32.totalorder %v1978, 0
    %v1987 = vsub.s32 0, %v1978
    %v1988 = vsel %vm1986, %v1987, %v1978
    %v1989 = vshrl.u32 %v1988, 1
    %v1990 = vand.u32 %v1988, 1
    %v1991 = vsub.s32 0, %v1990
    %v1992 = vsel %vm1986, %v1991, %v1990
    %vm1993 = vcmp.ne.s32.totalorder %v1985, 0
    %vm1994 = vcmp.ne.s32.totalorder %v1992, 0
    %vm1995 = vcmp.lt.s32.totalorder %v1985, 0
    %vm1996 = vcmp.lt.s32.totalorder %v1992, 0
    %vm1997 = vmand %vm1995, %vm1993
    %vm1998 = vmand %vm1996, %vm1994
    %v1999 = vadd.s32 %v1985, 2
    %v2000 = vadd.s32 %v1992, 2
    %v2001 = vsel %vm1997, %v1999, %v1985
    %v2002 = vsel %vm1998, %v2000, %v1992
    %vm2003 = vcmp.eq.s32.totalorder %v2001, 0
    %vm2004 = vcmp.eq.s32.totalorder %v2002, 0
    %v2005 = vsel %vm2003, %v1968, -inf
    %v2006 = vsel %vm2004, %v1973, -inf
    %v2007 = vmax.f32 %v2005, %v2006
    %v2008 = vrot.slane %v2007, 4
    %v2009 = vmax.f32 %v2007, %v2008
    %v2010 = vrot.slane %v2009, 2
    %v2011 = vmax.f32 %v2009, %v2010
    %v2012 = vrot.slane %v2011, 1
    %v2013 = vmax.f32 %v2011, %v2012
    %v2014 = vsub.f32 %v1968, %v2013
    %v2015 = vsub.f32 %v1973, %v2013
    %v2016 = vmul.f32 %v2014, 1.442695
    %v2017 = vpow.pop %v2016
    %v2018 = vmul.f32 %v2015, 1.442695
    %v2019 = vpow.pop %v2018
    %v2020 = vsel %vm2003, %v2017, 0.0
    %v2021 = vsel %vm2004, %v2019, 0.0
    %v2022 = vadd.f32 %v2020, %v2021
    %v2023 = vrot.slane %v2022, 4
    %v2024 = vadd.f32 %v2022, %v2023
    %v2025 = vrot.slane %v2024, 2
    %v2026 = vadd.f32 %v2024, %v2025
    %v2027 = vrot.slane %v2026, 1
    %v2028 = vadd.f32 %v2026, %v2027
    %v2029 = vlog2.pop %v2028
    %v2030 = vmul.f32 %v2029, 0.6931472
    %v2031 = vsub.f32 %v2014, %v2030
    %v2032 = vsub.f32 %v2015, %v2030
    %v2033 = vsel %vm2003, %v2031, 0.0
    %v2034 = vsel %vm2004, %v2032, 0.0
    %vm2035 = vcmp.eq.s32.totalorder %v2001, 1
    %vm2036 = vcmp.eq.s32.totalorder %v2002, 1
    %v2037 = vsel %vm2035, %v1968, -inf
    %v2038 = vsel %vm2036, %v1973, -inf
    %v2039 = vmax.f32 %v2037, %v2038
    %v2040 = vrot.slane %v2039, 4
    %v2041 = vmax.f32 %v2039, %v2040
    %v2042 = vrot.slane %v2041, 2
    %v2043 = vmax.f32 %v2041, %v2042
    %v2044 = vrot.slane %v2043, 1
    %v2045 = vmax.f32 %v2043, %v2044
    %v2046 = vsub.f32 %v1968, %v2045
    %v2047 = vsub.f32 %v1973, %v2045
    %v2048 = vmul.f32 %v2046, 1.442695
    %v2049 = vpow.pop %v2048
    %v2050 = vmul.f32 %v2047, 1.442695
    %v2051 = vpow.pop %v2050
    %v2052 = vsel %vm2035, %v2049, 0.0
    %v2053 = vsel %vm2036, %v2051, 0.0
    %v2054 = vadd.f32 %v2052, %v2053
    %v2055 = vrot.slane %v2054, 4
    %v2056 = vadd.f32 %v2054, %v2055
    %v2057 = vrot.slane %v2056, 2
    %v2058 = vadd.f32 %v2056, %v2057
    %v2059 = vrot.slane %v2058, 1
    %v2060 = vadd.f32 %v2058, %v2059
    %v2061 = vlog2.pop %v2060
    %v2062 = vmul.f32 %v2061, 0.6931472
    %v2063 = vsub.f32 %v2046, %v2062
    %v2064 = vsub.f32 %v2047, %v2062
    %v2065 = vsel %vm2035, %v2063, %v2033
    %v2066 = vsel %vm2036, %v2064, %v2034
    %2067 = vst [vmem:[%s8] sm:$0xff] %v2065
    %2068 = vst [vmem:[%s8 + $0x8] sm:$0xff] %v2066
    // Predicated region
    $region46: #{lstmnet_forward.1} parent=1 // pred_check
      _
    $region47: #{lstmnet_forward.1} parent=1 // pred_check_branch
      %2070 = sbr.rel (0) target = $region49
    $region48: #{lstmnet_forward.1} parent=1 // pred_region
      _
    $region49: #{lstmnet_forward.1} parent=1 // pred_fallthru
      _
    // Predicated region
    $region50: #{lstmnet_forward.1} parent=1 // pred_check
      _
    $region51: #{lstmnet_forward.1} parent=1 // pred_check_branch
      %2072 = sbr.rel (0) target = $region53
    $region52: #{lstmnet_forward.1} parent=1 // pred_region
      _
    $region53: #{lstmnet_forward.1} parent=1 // pred_fallthru
      _
    %2073 = vsyncpa [#allocation5], 1
    %2074 = vsyncpa [#allocation7], 1

</llo_original>
